<compile_context>
chip_gen: v5e
topology: v5e:2x2
jax: 0.10.0
libtpu: 0.0.40
codegen_flags: <defaults>
</compile_context>

<pallas_src>
import jax
import jax.numpy as jnp
from jax import lax
from jax.experimental import pallas as pl
from jax.experimental.pallas import tpu as pltpu

STATE_DIM = 20 * 4          # 80
ACTION_DIM = 4
NUM_EXPERTS = 3
HIDDEN = (256, 128, 64)
ROUTER_H1 = 128
GATE_H = 64
NEG_SLOPE = 0.01            # nn.LeakyReLU default

L1_ACT = HIDDEN[0] * (1 + NUM_EXPERTS) + ROUTER_H1   # 1152 leaky-activated cols
L1_TOTAL = L1_ACT + GATE_H                           # 1216 incl. folded gate-state cols


def _leaky(x):
    return jnp.where(x > 0, x, NEG_SLOPE * x)


# ---------------------------------------------------------------------------
# Kernel
# ---------------------------------------------------------------------------
def actor_kernel(x_ref,
                 W1, b1,                               # fused layer 1 (+ folded swWs)
                 shW2, shb2, shW3, shb3,               # shared expert
                 eW2_0, eW2_1, eW2_2, eb2,             # routed experts, layer 2 split
                 eW3, eb3,                             # routed experts, layer 3 block-diag
                 rW2, rb2, rWoT, rbo,                  # router
                 swWsh, swWr, swb1, swW2T, swb2,       # shared_weight_net (gate)
                 hW, hb,                               # fused action/std heads
                 out_ref):
    H1, H2, H3 = HIDDEN                                # 256, 128, 64
    cdt = W1.dtype                                     # MXU input dtype (bf16 or f32)
    xb = x_ref[...].astype(cdt)                        # (TB, 80), single hoisted cast

    def mm(a, w_ref):                                  # MXU dot, f32 accumulation
        return jnp.dot(a, w_ref[...], preferred_element_type=jnp.float32)

    def act(pre):                                      # leaky in f32, store in cdt
        return _leaky(pre).astype(cdt)

    # --- fused layer 1: [shared | e0 | e1 | e2 | router | gate-state(raw)] --
    xw = mm(xb, W1)                                    # (TB, 1216) f32
    h1 = act(xw[:, :L1_ACT] + b1[...])                 # (TB, 1152) cdt
    g_state = xw[:, L1_ACT:]                           # (TB, 64) f32, raw (no bias/act)

    sh_h1 = h1[:, :H1]                                 # (TB, 256)
    ex_h1 = h1[:, H1:4 * H1]                           # (TB, 768)
    rt_h1 = h1[:, 4 * H1:]                             # (TB, 128)

    # --- shared expert ------------------------------------------------------
    sh_h2 = act(mm(sh_h1, shW2) + shb2[...])           # (TB, 128) cdt
    shared_f = _leaky(mm(sh_h2, shW3) + shb3[...])     # (TB, 64) f32

    # --- routed experts: layer 2 split per expert (no zero-block MXU work) --
    ex_h2 = act(jnp.concatenate(
        [mm(ex_h1[:, 0:H1], eW2_0),
         mm(ex_h1[:, H1:2 * H1], eW2_1),
         mm(ex_h1[:, 2 * H1:3 * H1], eW2_2)], axis=-1) + eb2[...])   # (TB, 384) cdt
    # layer 3: block-diagonal (384,192) — 2 MXU passes on v6e/v7x
    ex_h3 = _leaky(mm(ex_h2, eW3) + eb3[...])          # (TB, 192) f32
    # TODO(synk): on v5e split eW3 into 3 per-expert (128,64) dots as well.

    # --- router: layer 2 on MXU; final N=3 projection on VPU/XLU ------------
    rt_h2 = _leaky(mm(rt_h1, rW2) + rb2[...])          # (TB, 64) f32
    wro = rWoT[...].astype(jnp.float32)                # (3, 64)
    rbo_v = rbo[...]                                   # (1, 3)
    l0 = jnp.sum(rt_h2 * wro[0:1, :], axis=-1, keepdims=True) + rbo_v[:, 0:1]
    l1 = jnp.sum(rt_h2 * wro[1:2, :], axis=-1, keepdims=True) + rbo_v[:, 1:2]
    l2 = jnp.sum(rt_h2 * wro[2:3, :], axis=-1, keepdims=True) + rbo_v[:, 2:3]
    m = jnp.maximum(jnp.maximum(l0, l1), l2)
    e0, e1, e2 = jnp.exp(l0 - m), jnp.exp(l1 - m), jnp.exp(l2 - m)
    inv = 1.0 / (e0 + e1 + e2)
    routed_f = (ex_h3[:, 0:H3] * (e0 * inv)
                + ex_h3[:, H3:2 * H3] * (e1 * inv)
                + ex_h3[:, 2 * H3:3 * H3] * (e2 * inv))            # (TB, 64) f32

    # --- gate: state cols folded in W1; shared/routed on MXU; N=1 on VPU ----
    g = _leaky(g_state + mm(shared_f.astype(cdt), swWsh)
               + mm(routed_f.astype(cdt), swWr) + swb1[...])       # (TB, 64) f32
    gate = jax.nn.sigmoid(jnp.sum(g * swW2T[...].astype(jnp.float32),
                                  axis=-1, keepdims=True) + swb2[...])   # (TB, 1)

    combined = gate * shared_f + (1.0 - gate) * routed_f           # (TB, 64) f32

    # --- fused heads: one matmul, lane-mask epilogue, single packed store ---
    head = mm(combined.astype(cdt), hW) + hb[...]                  # (TB, 8) f32
    lane = lax.broadcasted_iota(jnp.int32, head.shape, 1)
    out_ref[...] = jnp.where(lane < ACTION_DIM,
                             jnp.tanh(head),
                             jax.nn.sigmoid(head) * 0.69 + 0.01)


# ---------------------------------------------------------------------------
# Wrapper
# ---------------------------------------------------------------------------
def actor_forward(state, kernel_params, cast_to_mxu, *, block_b=512,
                  compute_dtype=jnp.bfloat16):
    """state: (B, STATE_DIM) f32. Returns (mean, std), each (B, ACTION_DIM) f32."""
    state = state.astype(jnp.float32)
    B = state.shape[0]

    # block_b must be a multiple of 8; cap at ~half the batch so the
    # "parallel" grid has >= 2 steps whenever the batch allows (v7x megacore).
    block_b = max(8, (block_b // 8) * 8)
    half = max(8, ((B + 1) // 2 + 7) // 8 * 8)
    block_b = min(block_b, half)
    Bp = ((B + block_b - 1) // block_b) * block_b
    if Bp != B:
        state = jnp.pad(state, ((0, Bp - B), (0, 0)))

    # MXU weights -> compute_dtype (bf16 native on all generations incl. v5e);
    # biases and VPU-path weights stay f32 (elementwise math is f32).
    params = [p.astype(compute_dtype) if mxu else p.astype(jnp.float32)
              for p, mxu in zip(kernel_params, cast_to_mxu)]

    grid = (Bp // block_b,)
    state_spec = pl.BlockSpec((block_b, STATE_DIM), lambda i: (i, 0))
    weight_specs = [pl.BlockSpec(p.shape, lambda i: (0, 0)) for p in params]
    out_spec = pl.BlockSpec((block_b, 2 * ACTION_DIM), lambda i: (i, 0))

    out = pl.pallas_call(
        actor_kernel,
        out_shape=jax.ShapeDtypeStruct((Bp, 2 * ACTION_DIM), jnp.float32),
        grid_spec=pltpu.PrefetchScalarGridSpec(
            num_scalar_prefetch=0,
            grid=grid,
            in_specs=[state_spec] + weight_specs,
            out_specs=out_spec),
        compiler_params=pltpu.CompilerParams(
            dimension_semantics=("parallel",)),
    )(state, *params)

    return out[:B, :ACTION_DIM], out[:B, ACTION_DIM:]


# ---------------------------------------------------------------------------
# Parameter init (mirrors weights_init: Xavier-uniform W, zero b) and fusion
# ---------------------------------------------------------------------------
def init_raw_params(key):
    ks = iter(jax.random.split(key, 40))

    def lin(fan_in, fan_out):
        bound = (6.0 / (fan_in + fan_out)) ** 0.5
        W = jax.random.uniform(next(ks), (fan_in, fan_out), jnp.float32, -bound, bound)
        b = jnp.zeros((1, fan_out), jnp.float32)
        return W, b

    H1, H2, H3 = HIDDEN
    return {
        "shared": [lin(STATE_DIM, H1), lin(H1, H2), lin(H2, H3)],
        "experts": [[lin(STATE_DIM, H1), lin(H1, H2), lin(H2, H3)]
                    for _ in range(NUM_EXPERTS)],
        "router": [lin(STATE_DIM, ROUTER_H1), lin(ROUTER_H1, 64), lin(64, NUM_EXPERTS)],
        "sw": [lin(STATE_DIM + 2 * H3, GATE_H), lin(GATE_H, 1)],
        "heads": [lin(H3, ACTION_DIM), lin(H3, ACTION_DIM)],
    }


def fuse_params(p):
    """Build the fused / split / block-diagonal weights the kernel consumes."""
    (shW1, shb1), (shW2, shb2), (shW3, shb3) = p["shared"]
    ex = p["experts"]
    (rW1, rb1), (rW2, rb2), (rWo, rbo) = p["router"]
    (swW1, swb1), (swW2, swb2) = p["sw"]
    (aW, ab), (sW, sb) = p["heads"]
    H3 = HIDDEN[2]

    # shared_weight_net layer 1 split into [state | shared | routed] row blocks
    swWs = swW1[:STATE_DIM]
    swWsh = swW1[STATE_DIM:STATE_DIM + H3]
    swWr = swW1[STATE_DIM + H3:]

    # fused layer 1: [shared | e0 | e1 | e2 | router | gate-state(raw)]
    W1_cat = jnp.concatenate([shW1] + [ex[e][0][0] for e in range(NUM_EXPERTS)]
                             + [rW1, swWs], axis=1)              # (80, 1216)
    b1_cat = jnp.concatenate([shb1] + [ex[e][0][1] for e in range(NUM_EXPERTS)]
                             + [rb1], axis=1)                    # (1, 1152)

    eW2_split = [ex[e][1][0] for e in range(NUM_EXPERTS)]        # 3 x (256, 128)
    eb2_cat = jnp.concatenate([ex[e][1][1] for e in range(NUM_EXPERTS)], axis=1)
    eW3_bd = jax.scipy.linalg.block_diag(*[ex[e][2][0] for e in range(NUM_EXPERTS)])
    eb3_cat = jnp.concatenate([ex[e][2][1] for e in range(NUM_EXPERTS)], axis=1)

    headW = jnp.concatenate([aW, sW], axis=1)                    # (64, 8)
    headb = jnp.concatenate([ab, sb], axis=1)                    # (1, 8)

    params = [W1_cat, b1_cat,
              shW2, shb2, shW3, shb3,
              eW2_split[0], eW2_split[1], eW2_split[2], eb2_cat,
              eW3_bd, eb3_cat,
              rW2, rb2, rWo.T, rbo,
              swWsh, swWr, swb1, swW2.T, swb2,
              headW, headb]
    cast_to_mxu = [True, False,
                   True, False, True, False,
                   True, True, True, False,
                   True, False,
                   True, False, False, False,
                   True, True, False, False, False,
                   True, False]
    return params, cast_to_mxu


# ---------------------------------------------------------------------------
# Pure-JAX reference of the PyTorch forward (for verification)
# ---------------------------------------------------------------------------
def actor_ref(state, p):
    def leaky(v):
        return jnp.where(v > 0, v, NEG_SLOPE * v)

    def mlp(x, layers):
        h = x
        for W, b in layers:
            h = leaky(h @ W + b)
        return h

    shared = mlp(state, p["shared"])
    expert_outs = jnp.stack([mlp(state, p["experts"][e]) for e in range(NUM_EXPERTS)], axis=1)

    (rW1, rb1), (rW2, rb2), (rWo, rbo) = p["router"]
    h = leaky(state @ rW1 + rb1)
    h = leaky(h @ rW2 + rb2)
    rw = jax.nn.softmax(h @ rWo + rbo, axis=-1)
    routed = jnp.sum(expert_outs * rw[:, :, None], axis=1)

    (swW1, swb1), (swW2, swb2) = p["sw"]
    combined_in = jnp.concatenate([state, shared, routed], axis=-1)
    g = leaky(combined_in @ swW1 + swb1)
    gate = jax.nn.sigmoid(g @ swW2 + swb2)
    combined = gate * shared + (1.0 - gate) * routed

    (aW, ab), (sW, sb) = p["heads"]
    mean = jnp.tanh(combined @ aW + ab)
    std = jax.nn.sigmoid(combined @ sW + sb) * 0.69 + 0.01
    return mean, std


# ---------------------------------------------------------------------------
# Self test
# ---------------------------------------------------------------------------
if __name__ == "__main__":
    key = jax.random.PRNGKey(0)
    k_state, k_params = jax.random.split(key)

    raw = init_raw_params(k_params)
    kernel_params, cast_to_mxu = fuse_params(raw)

    # 1) Exact-semantics check: f32 MXU inputs, small batch (padding path).
    state_small = jax.random.normal(k_state, (8, STATE_DIM), jnp.float32)
    mean, std = jax.block_until_ready(actor_forward(
        state_small, kernel_params, cast_to_mxu, block_b=128,
        compute_dtype=jnp.float32))
    ref_mean, ref_std = actor_ref(state_small, raw)
    assert mean.shape == (8, ACTION_DIM) and std.shape == (8, ACTION_DIM)
    assert jnp.allclose(mean, ref_mean, atol=1e-4), float(jnp.max(jnp.abs(mean - ref_mean)))
    assert jnp.allclose(std, ref_std, atol=1e-4), float(jnp.max(jnp.abs(std - ref_std)))

    # 2) Performance config: bf16 MXU inputs (f32 accumulation), >=2 grid steps.
    state_big = jax.random.normal(k_state, (32, STATE_DIM), jnp.float32)
    mean_b, std_b = jax.block_until_ready(actor_forward(
        state_big, kernel_params, cast_to_mxu, compute_dtype=jnp.bfloat16))
    ref_mean_b, ref_std_b = actor_ref(state_big, raw)
    assert jnp.allclose(mean_b, ref_mean_b, atol=5e-2), float(jnp.max(jnp.abs(mean_b - ref_mean_b)))
    assert jnp.allclose(std_b, ref_std_b, atol=5e-2), float(jnp.max(jnp.abs(std_b - ref_std_b)))

    # TODO(synk): action sampling / log_prob (torch.distributions) are host-side
    # utilities built on (mean, std) and are intentionally not in the kernel.
    print("KERNEL_OK")
</pallas_src>

<mosaic_0001>
module attributes {stable_mosaic.version = 11 : i64} {
  func.func @actor_kernel(%arg0: i32, %arg1: memref<8x80xf32, #tpu.memory_space<vmem>>, %arg2: memref<80x1216xf32, #tpu.memory_space<vmem>>, %arg3: memref<1x1152xf32, #tpu.memory_space<vmem>>, %arg4: memref<256x128xf32, #tpu.memory_space<vmem>>, %arg5: memref<1x128xf32, #tpu.memory_space<vmem>>, %arg6: memref<128x64xf32, #tpu.memory_space<vmem>>, %arg7: memref<1x64xf32, #tpu.memory_space<vmem>>, %arg8: memref<256x128xf32, #tpu.memory_space<vmem>>, %arg9: memref<256x128xf32, #tpu.memory_space<vmem>>, %arg10: memref<256x128xf32, #tpu.memory_space<vmem>>, %arg11: memref<1x384xf32, #tpu.memory_space<vmem>>, %arg12: memref<384x192xf32, #tpu.memory_space<vmem>>, %arg13: memref<1x192xf32, #tpu.memory_space<vmem>>, %arg14: memref<128x64xf32, #tpu.memory_space<vmem>>, %arg15: memref<1x64xf32, #tpu.memory_space<vmem>>, %arg16: memref<3x64xf32, #tpu.memory_space<vmem>>, %arg17: memref<1x3xf32, #tpu.memory_space<vmem>>, %arg18: memref<64x64xf32, #tpu.memory_space<vmem>>, %arg19: memref<64x64xf32, #tpu.memory_space<vmem>>, %arg20: memref<1x64xf32, #tpu.memory_space<vmem>>, %arg21: memref<1x64xf32, #tpu.memory_space<vmem>>, %arg22: memref<1x1xf32, #tpu.memory_space<vmem>>, %arg23: memref<64x8xf32, #tpu.memory_space<vmem>>, %arg24: memref<1x8xf32, #tpu.memory_space<vmem>>, %arg25: memref<8x8xf32, #tpu.memory_space<vmem>>) attributes {dimension_semantics = [#tpu.dimension_semantics<parallel>], iteration_bounds = array<i64: 1>, scalar_prefetch = 0 : i64, scratch_operands = 0 : i64, tpu.core_type = #tpu.core_type<tc>, window_params = [{transform_indices = @transform_0, window_bounds = array<i64: 8, 80>}, {pipeline_mode = #tpu.pipeline_mode<synchronous>, transform_indices = @transform_1, window_bounds = array<i64: 80, 1216>}, {pipeline_mode = #tpu.pipeline_mode<synchronous>, transform_indices = @transform_2, window_bounds = array<i64: 1, 1152>}, {pipeline_mode = #tpu.pipeline_mode<synchronous>, transform_indices = @transform_3, window_bounds = array<i64: 256, 128>}, {pipeline_mode = #tpu.pipeline_mode<synchronous>, transform_indices = @transform_4, window_bounds = array<i64: 1, 128>}, {pipeline_mode = #tpu.pipeline_mode<synchronous>, transform_indices = @transform_5, window_bounds = array<i64: 128, 64>}, {pipeline_mode = #tpu.pipeline_mode<synchronous>, transform_indices = @transform_6, window_bounds = array<i64: 1, 64>}, {pipeline_mode = #tpu.pipeline_mode<synchronous>, transform_indices = @transform_7, window_bounds = array<i64: 256, 128>}, {pipeline_mode = #tpu.pipeline_mode<synchronous>, transform_indices = @transform_8, window_bounds = array<i64: 256, 128>}, {pipeline_mode = #tpu.pipeline_mode<synchronous>, transform_indices = @transform_9, window_bounds = array<i64: 256, 128>}, {pipeline_mode = #tpu.pipeline_mode<synchronous>, transform_indices = @transform_10, window_bounds = array<i64: 1, 384>}, {pipeline_mode = #tpu.pipeline_mode<synchronous>, transform_indices = @transform_11, window_bounds = array<i64: 384, 192>}, {pipeline_mode = #tpu.pipeline_mode<synchronous>, transform_indices = @transform_12, window_bounds = array<i64: 1, 192>}, {pipeline_mode = #tpu.pipeline_mode<synchronous>, transform_indices = @transform_13, window_bounds = array<i64: 128, 64>}, {pipeline_mode = #tpu.pipeline_mode<synchronous>, transform_indices = @transform_14, window_bounds = array<i64: 1, 64>}, {pipeline_mode = #tpu.pipeline_mode<synchronous>, transform_indices = @transform_15, window_bounds = array<i64: 3, 64>}, {pipeline_mode = #tpu.pipeline_mode<synchronous>, transform_indices = @transform_16, window_bounds = array<i64: 1, 3>}, {pipeline_mode = #tpu.pipeline_mode<synchronous>, transform_indices = @transform_17, window_bounds = array<i64: 64, 64>}, {pipeline_mode = #tpu.pipeline_mode<synchronous>, transform_indices = @transform_18, window_bounds = array<i64: 64, 64>}, {pipeline_mode = #tpu.pipeline_mode<synchronous>, transform_indices = @transform_19, window_bounds = array<i64: 1, 64>}, {pipeline_mode = #tpu.pipeline_mode<synchronous>, transform_indices = @transform_20, window_bounds = array<i64: 1, 64>}, {pipeline_mode = #tpu.pipeline_mode<synchronous>, transform_indices = @transform_21, window_bounds = array<i64: 1, 1>}, {pipeline_mode = #tpu.pipeline_mode<synchronous>, transform_indices = @transform_22, window_bounds = array<i64: 64, 8>}, {pipeline_mode = #tpu.pipeline_mode<synchronous>, transform_indices = @transform_23, window_bounds = array<i64: 1, 8>}, {transform_indices = @transform_24, window_bounds = array<i64: 8, 8>}]} {
    %c0 = arith.constant 0 : index
    %c0_0 = arith.constant 0 : index
    %0 = vector.load %arg1[%c0, %c0_0] : memref<8x80xf32, #tpu.memory_space<vmem>>, vector<8x80xf32>
    %c0_1 = arith.constant 0 : index
    %c0_2 = arith.constant 0 : index
    %1 = vector.load %arg2[%c0_1, %c0_2] : memref<80x1216xf32, #tpu.memory_space<vmem>>, vector<80x1216xf32>
    %cst = arith.constant dense<0.000000e+00> : vector<8x1216xf32>
    %2 = tpu.matmul %0, %1, %cst {dimension_numbers = #tpu.dot_dimension_numbers<[1], [0], [0], [1], [0, 0, 1, 1], [], []>} : vector<8x80xf32>, vector<80x1216xf32>, vector<8x1216xf32> -> vector<8x1216xf32>
    %3 = vector.extract_strided_slice %2 {offsets = [0, 0], sizes = [8, 1152], strides = [1, 1]} : vector<8x1216xf32> to vector<8x1152xf32>
    %c0_3 = arith.constant 0 : index
    %c0_4 = arith.constant 0 : index
    %4 = vector.load %arg3[%c0_3, %c0_4] : memref<1x1152xf32, #tpu.memory_space<vmem>>, vector<1x1152xf32>
    %5 = vector.broadcast %4 : vector<1x1152xf32> to vector<8x1152xf32>
    %6 = arith.addf %3, %5 : vector<8x1152xf32>
    %cst_5 = arith.constant 0.000000e+00 : f32
    %7 = vector.broadcast %cst_5 : f32 to vector<8x1152xf32>
    %8 = arith.cmpf ogt, %6, %7 : vector<8x1152xf32>
    %cst_6 = arith.constant 0.00999999977 : f32
    %9 = vector.broadcast %cst_6 : f32 to vector<8x1152xf32>
    %10 = arith.mulf %9, %6 : vector<8x1152xf32>
    %11 = arith.select %8, %6, %10 : vector<8x1152xi1>, vector<8x1152xf32>
    %12 = vector.extract_strided_slice %2 {offsets = [0, 1152], sizes = [8, 64], strides = [1, 1]} : vector<8x1216xf32> to vector<8x64xf32>
    %13 = vector.extract_strided_slice %11 {offsets = [0, 0], sizes = [8, 256], strides = [1, 1]} : vector<8x1152xf32> to vector<8x256xf32>
    %14 = vector.extract_strided_slice %11 {offsets = [0, 256], sizes = [8, 768], strides = [1, 1]} : vector<8x1152xf32> to vector<8x768xf32>
    %15 = vector.extract_strided_slice %11 {offsets = [0, 1024], sizes = [8, 128], strides = [1, 1]} : vector<8x1152xf32> to vector<8x128xf32>
    %c0_7 = arith.constant 0 : index
    %c0_8 = arith.constant 0 : index
    %16 = vector.load %arg4[%c0_7, %c0_8] : memref<256x128xf32, #tpu.memory_space<vmem>>, vector<256x128xf32>
    %cst_9 = arith.constant dense<0.000000e+00> : vector<8x128xf32>
    %17 = tpu.matmul %13, %16, %cst_9 {dimension_numbers = #tpu.dot_dimension_numbers<[1], [0], [0], [1], [0, 0, 1, 1], [], []>} : vector<8x256xf32>, vector<256x128xf32>, vector<8x128xf32> -> vector<8x128xf32>
    %c0_10 = arith.constant 0 : index
    %c0_11 = arith.constant 0 : index
    %18 = vector.load %arg5[%c0_10, %c0_11] : memref<1x128xf32, #tpu.memory_space<vmem>>, vector<1x128xf32>
    %19 = vector.broadcast %18 : vector<1x128xf32> to vector<8x128xf32>
    %20 = arith.addf %17, %19 : vector<8x128xf32>
    %cst_12 = arith.constant 0.000000e+00 : f32
    %21 = vector.broadcast %cst_12 : f32 to vector<8x128xf32>
    %22 = arith.cmpf ogt, %20, %21 : vector<8x128xf32>
    %cst_13 = arith.constant 0.00999999977 : f32
    %23 = vector.broadcast %cst_13 : f32 to vector<8x128xf32>
    %24 = arith.mulf %23, %20 : vector<8x128xf32>
    %25 = arith.select %22, %20, %24 : vector<8x128xi1>, vector<8x128xf32>
    %c0_14 = arith.constant 0 : index
    %c0_15 = arith.constant 0 : index
    %26 = vector.load %arg6[%c0_14, %c0_15] : memref<128x64xf32, #tpu.memory_space<vmem>>, vector<128x64xf32>
    %cst_16 = arith.constant dense<0.000000e+00> : vector<8x64xf32>
    %27 = tpu.matmul %25, %26, %cst_16 {dimension_numbers = #tpu.dot_dimension_numbers<[1], [0], [0], [1], [0, 0, 1, 1], [], []>} : vector<8x128xf32>, vector<128x64xf32>, vector<8x64xf32> -> vector<8x64xf32>
    %c0_17 = arith.constant 0 : index
    %c0_18 = arith.constant 0 : index
    %28 = vector.load %arg7[%c0_17, %c0_18] : memref<1x64xf32, #tpu.memory_space<vmem>>, vector<1x64xf32>
    %29 = vector.broadcast %28 : vector<1x64xf32> to vector<8x64xf32>
    %30 = arith.addf %27, %29 : vector<8x64xf32>
    %cst_19 = arith.constant 0.000000e+00 : f32
    %31 = vector.broadcast %cst_19 : f32 to vector<8x64xf32>
    %32 = arith.cmpf ogt, %30, %31 : vector<8x64xf32>
    %cst_20 = arith.constant 0.00999999977 : f32
    %33 = vector.broadcast %cst_20 : f32 to vector<8x64xf32>
    %34 = arith.mulf %33, %30 : vector<8x64xf32>
    %35 = arith.select %32, %30, %34 : vector<8x64xi1>, vector<8x64xf32>
    %36 = vector.extract_strided_slice %14 {offsets = [0, 0], sizes = [8, 256], strides = [1, 1]} : vector<8x768xf32> to vector<8x256xf32>
    %c0_21 = arith.constant 0 : index
    %c0_22 = arith.constant 0 : index
    %37 = vector.load %arg8[%c0_21, %c0_22] : memref<256x128xf32, #tpu.memory_space<vmem>>, vector<256x128xf32>
    %cst_23 = arith.constant dense<0.000000e+00> : vector<8x128xf32>
    %38 = tpu.matmul %36, %37, %cst_23 {dimension_numbers = #tpu.dot_dimension_numbers<[1], [0], [0], [1], [0, 0, 1, 1], [], []>} : vector<8x256xf32>, vector<256x128xf32>, vector<8x128xf32> -> vector<8x128xf32>
    %39 = vector.extract_strided_slice %14 {offsets = [0, 256], sizes = [8, 256], strides = [1, 1]} : vector<8x768xf32> to vector<8x256xf32>
    %c0_24 = arith.constant 0 : index
    %c0_25 = arith.constant 0 : index
    %40 = vector.load %arg9[%c0_24, %c0_25] : memref<256x128xf32, #tpu.memory_space<vmem>>, vector<256x128xf32>
    %cst_26 = arith.constant dense<0.000000e+00> : vector<8x128xf32>
    %41 = tpu.matmul %39, %40, %cst_26 {dimension_numbers = #tpu.dot_dimension_numbers<[1], [0], [0], [1], [0, 0, 1, 1], [], []>} : vector<8x256xf32>, vector<256x128xf32>, vector<8x128xf32> -> vector<8x128xf32>
    %42 = vector.extract_strided_slice %14 {offsets = [0, 512], sizes = [8, 256], strides = [1, 1]} : vector<8x768xf32> to vector<8x256xf32>
    %c0_27 = arith.constant 0 : index
    %c0_28 = arith.constant 0 : index
    %43 = vector.load %arg10[%c0_27, %c0_28] : memref<256x128xf32, #tpu.memory_space<vmem>>, vector<256x128xf32>
    %cst_29 = arith.constant dense<0.000000e+00> : vector<8x128xf32>
    %44 = tpu.matmul %42, %43, %cst_29 {dimension_numbers = #tpu.dot_dimension_numbers<[1], [0], [0], [1], [0, 0, 1, 1], [], []>} : vector<8x256xf32>, vector<256x128xf32>, vector<8x128xf32> -> vector<8x128xf32>
    %45 = tpu.concatenate %38, %41, %44 in 1 : vector<8x128xf32>, vector<8x128xf32>, vector<8x128xf32> -> vector<8x384xf32>
    %c0_30 = arith.constant 0 : index
    %c0_31 = arith.constant 0 : index
    %46 = vector.load %arg11[%c0_30, %c0_31] : memref<1x384xf32, #tpu.memory_space<vmem>>, vector<1x384xf32>
    %47 = vector.broadcast %46 : vector<1x384xf32> to vector<8x384xf32>
    %48 = arith.addf %45, %47 : vector<8x384xf32>
    %cst_32 = arith.constant 0.000000e+00 : f32
    %49 = vector.broadcast %cst_32 : f32 to vector<8x384xf32>
    %50 = arith.cmpf ogt, %48, %49 : vector<8x384xf32>
    %cst_33 = arith.constant 0.00999999977 : f32
    %51 = vector.broadcast %cst_33 : f32 to vector<8x384xf32>
    %52 = arith.mulf %51, %48 : vector<8x384xf32>
    %53 = arith.select %50, %48, %52 : vector<8x384xi1>, vector<8x384xf32>
    %c0_34 = arith.constant 0 : index
    %c0_35 = arith.constant 0 : index
    %54 = vector.load %arg12[%c0_34, %c0_35] : memref<384x192xf32, #tpu.memory_space<vmem>>, vector<384x192xf32>
    %cst_36 = arith.constant dense<0.000000e+00> : vector<8x192xf32>
    %55 = tpu.matmul %53, %54, %cst_36 {dimension_numbers = #tpu.dot_dimension_numbers<[1], [0], [0], [1], [0, 0, 1, 1], [], []>} : vector<8x384xf32>, vector<384x192xf32>, vector<8x192xf32> -> vector<8x192xf32>
    %c0_37 = arith.constant 0 : index
    %c0_38 = arith.constant 0 : index
    %56 = vector.load %arg13[%c0_37, %c0_38] : memref<1x192xf32, #tpu.memory_space<vmem>>, vector<1x192xf32>
    %57 = vector.broadcast %56 : vector<1x192xf32> to vector<8x192xf32>
    %58 = arith.addf %55, %57 : vector<8x192xf32>
    %cst_39 = arith.constant 0.000000e+00 : f32
    %59 = vector.broadcast %cst_39 : f32 to vector<8x192xf32>
    %60 = arith.cmpf ogt, %58, %59 : vector<8x192xf32>
    %cst_40 = arith.constant 0.00999999977 : f32
    %61 = vector.broadcast %cst_40 : f32 to vector<8x192xf32>
    %62 = arith.mulf %61, %58 : vector<8x192xf32>
    %63 = arith.select %60, %58, %62 : vector<8x192xi1>, vector<8x192xf32>
    %c0_41 = arith.constant 0 : index
    %c0_42 = arith.constant 0 : index
    %64 = vector.load %arg14[%c0_41, %c0_42] : memref<128x64xf32, #tpu.memory_space<vmem>>, vector<128x64xf32>
    %cst_43 = arith.constant dense<0.000000e+00> : vector<8x64xf32>
    %65 = tpu.matmul %15, %64, %cst_43 {dimension_numbers = #tpu.dot_dimension_numbers<[1], [0], [0], [1], [0, 0, 1, 1], [], []>} : vector<8x128xf32>, vector<128x64xf32>, vector<8x64xf32> -> vector<8x64xf32>
    %c0_44 = arith.constant 0 : index
    %c0_45 = arith.constant 0 : index
    %66 = vector.load %arg15[%c0_44, %c0_45] : memref<1x64xf32, #tpu.memory_space<vmem>>, vector<1x64xf32>
    %67 = vector.broadcast %66 : vector<1x64xf32> to vector<8x64xf32>
    %68 = arith.addf %65, %67 : vector<8x64xf32>
    %cst_46 = arith.constant 0.000000e+00 : f32
    %69 = vector.broadcast %cst_46 : f32 to vector<8x64xf32>
    %70 = arith.cmpf ogt, %68, %69 : vector<8x64xf32>
    %cst_47 = arith.constant 0.00999999977 : f32
    %71 = vector.broadcast %cst_47 : f32 to vector<8x64xf32>
    %72 = arith.mulf %71, %68 : vector<8x64xf32>
    %73 = arith.select %70, %68, %72 : vector<8x64xi1>, vector<8x64xf32>
    %c0_48 = arith.constant 0 : index
    %c0_49 = arith.constant 0 : index
    %74 = vector.load %arg16[%c0_48, %c0_49] : memref<3x64xf32, #tpu.memory_space<vmem>>, vector<3x64xf32>
    %c0_50 = arith.constant 0 : index
    %c0_51 = arith.constant 0 : index
    %75 = vector.load %arg17[%c0_50, %c0_51] : memref<1x3xf32, #tpu.memory_space<vmem>>, vector<1x3xf32>
    %76 = vector.extract_strided_slice %74 {offsets = [0, 0], sizes = [1, 64], strides = [1, 1]} : vector<3x64xf32> to vector<1x64xf32>
    %77 = vector.broadcast %76 : vector<1x64xf32> to vector<8x64xf32>
    %78 = arith.mulf %73, %77 : vector<8x64xf32>
    %cst_52 = arith.constant dense<0.000000e+00> : vector<8xf32>
    %79 = vector.multi_reduction <add>, %78, %cst_52 [1] : vector<8x64xf32> to vector<8xf32>
    %80 = vector.shape_cast %79 : vector<8xf32> to vector<8x1xf32>
    %81 = vector.extract_strided_slice %75 {offsets = [0, 0], sizes = [1, 1], strides = [1, 1]} : vector<1x3xf32> to vector<1x1xf32>
    %82 = vector.broadcast %81 : vector<1x1xf32> to vector<8x1xf32>
    %83 = arith.addf %80, %82 : vector<8x1xf32>
    %84 = vector.extract_strided_slice %74 {offsets = [1, 0], sizes = [1, 64], strides = [1, 1]} : vector<3x64xf32> to vector<1x64xf32>
    %85 = vector.broadcast %84 : vector<1x64xf32> to vector<8x64xf32>
    %86 = arith.mulf %73, %85 : vector<8x64xf32>
    %cst_53 = arith.constant dense<0.000000e+00> : vector<8xf32>
    %87 = vector.multi_reduction <add>, %86, %cst_53 [1] : vector<8x64xf32> to vector<8xf32>
    %88 = vector.shape_cast %87 : vector<8xf32> to vector<8x1xf32>
    %89 = vector.extract_strided_slice %75 {offsets = [0, 1], sizes = [1, 1], strides = [1, 1]} : vector<1x3xf32> to vector<1x1xf32>
    %90 = vector.broadcast %89 : vector<1x1xf32> to vector<8x1xf32>
    %91 = arith.addf %88, %90 : vector<8x1xf32>
    %92 = vector.extract_strided_slice %74 {offsets = [2, 0], sizes = [1, 64], strides = [1, 1]} : vector<3x64xf32> to vector<1x64xf32>
    %93 = vector.broadcast %92 : vector<1x64xf32> to vector<8x64xf32>
    %94 = arith.mulf %73, %93 : vector<8x64xf32>
    %cst_54 = arith.constant dense<0.000000e+00> : vector<8xf32>
    %95 = vector.multi_reduction <add>, %94, %cst_54 [1] : vector<8x64xf32> to vector<8xf32>
    %96 = vector.shape_cast %95 : vector<8xf32> to vector<8x1xf32>
    %97 = vector.extract_strided_slice %75 {offsets = [0, 2], sizes = [1, 1], strides = [1, 1]} : vector<1x3xf32> to vector<1x1xf32>
    %98 = vector.broadcast %97 : vector<1x1xf32> to vector<8x1xf32>
    %99 = arith.addf %96, %98 : vector<8x1xf32>
    %100 = arith.maximumf %83, %91 : vector<8x1xf32>
    %101 = arith.maximumf %100, %99 : vector<8x1xf32>
    %102 = arith.subf %83, %101 : vector<8x1xf32>
    %103 = math.exp %102 : vector<8x1xf32>
    %104 = arith.subf %91, %101 : vector<8x1xf32>
    %105 = math.exp %104 : vector<8x1xf32>
    %106 = arith.subf %99, %101 : vector<8x1xf32>
    %107 = math.exp %106 : vector<8x1xf32>
    %108 = arith.addf %103, %105 : vector<8x1xf32>
    %109 = arith.addf %108, %107 : vector<8x1xf32>
    %cst_55 = arith.constant 1.000000e+00 : f32
    %110 = vector.broadcast %cst_55 : f32 to vector<8x1xf32>
    %111 = arith.divf %110, %109 : vector<8x1xf32>
    %112 = vector.extract_strided_slice %63 {offsets = [0, 0], sizes = [8, 64], strides = [1, 1]} : vector<8x192xf32> to vector<8x64xf32>
    %113 = arith.mulf %103, %111 : vector<8x1xf32>
    %114 = vector.broadcast %113 : vector<8x1xf32> to vector<8x64xf32>
    %115 = arith.mulf %112, %114 : vector<8x64xf32>
    %116 = vector.extract_strided_slice %63 {offsets = [0, 64], sizes = [8, 64], strides = [1, 1]} : vector<8x192xf32> to vector<8x64xf32>
    %117 = arith.mulf %105, %111 : vector<8x1xf32>
    %118 = vector.broadcast %117 : vector<8x1xf32> to vector<8x64xf32>
    %119 = arith.mulf %116, %118 : vector<8x64xf32>
    %120 = arith.addf %115, %119 : vector<8x64xf32>
    %121 = vector.extract_strided_slice %63 {offsets = [0, 128], sizes = [8, 64], strides = [1, 1]} : vector<8x192xf32> to vector<8x64xf32>
    %122 = arith.mulf %107, %111 : vector<8x1xf32>
    %123 = vector.broadcast %122 : vector<8x1xf32> to vector<8x64xf32>
    %124 = arith.mulf %121, %123 : vector<8x64xf32>
    %125 = arith.addf %120, %124 : vector<8x64xf32>
    %c0_56 = arith.constant 0 : index
    %c0_57 = arith.constant 0 : index
    %126 = vector.load %arg18[%c0_56, %c0_57] : memref<64x64xf32, #tpu.memory_space<vmem>>, vector<64x64xf32>
    %cst_58 = arith.constant dense<0.000000e+00> : vector<8x64xf32>
    %127 = tpu.matmul %35, %126, %cst_58 {dimension_numbers = #tpu.dot_dimension_numbers<[1], [0], [0], [1], [0, 0, 1, 1], [], []>} : vector<8x64xf32>, vector<64x64xf32>, vector<8x64xf32> -> vector<8x64xf32>
    %128 = arith.addf %12, %127 : vector<8x64xf32>
    %c0_59 = arith.constant 0 : index
    %c0_60 = arith.constant 0 : index
    %129 = vector.load %arg19[%c0_59, %c0_60] : memref<64x64xf32, #tpu.memory_space<vmem>>, vector<64x64xf32>
    %cst_61 = arith.constant dense<0.000000e+00> : vector<8x64xf32>
    %130 = tpu.matmul %125, %129, %cst_61 {dimension_numbers = #tpu.dot_dimension_numbers<[1], [0], [0], [1], [0, 0, 1, 1], [], []>} : vector<8x64xf32>, vector<64x64xf32>, vector<8x64xf32> -> vector<8x64xf32>
    %131 = arith.addf %128, %130 : vector<8x64xf32>
    %c0_62 = arith.constant 0 : index
    %c0_63 = arith.constant 0 : index
    %132 = vector.load %arg20[%c0_62, %c0_63] : memref<1x64xf32, #tpu.memory_space<vmem>>, vector<1x64xf32>
    %133 = vector.broadcast %132 : vector<1x64xf32> to vector<8x64xf32>
    %134 = arith.addf %131, %133 : vector<8x64xf32>
    %cst_64 = arith.constant 0.000000e+00 : f32
    %135 = vector.broadcast %cst_64 : f32 to vector<8x64xf32>
    %136 = arith.cmpf ogt, %134, %135 : vector<8x64xf32>
    %cst_65 = arith.constant 0.00999999977 : f32
    %137 = vector.broadcast %cst_65 : f32 to vector<8x64xf32>
    %138 = arith.mulf %137, %134 : vector<8x64xf32>
    %139 = arith.select %136, %134, %138 : vector<8x64xi1>, vector<8x64xf32>
    %c0_66 = arith.constant 0 : index
    %c0_67 = arith.constant 0 : index
    %140 = vector.load %arg21[%c0_66, %c0_67] : memref<1x64xf32, #tpu.memory_space<vmem>>, vector<1x64xf32>
    %141 = vector.broadcast %140 : vector<1x64xf32> to vector<8x64xf32>
    %142 = arith.mulf %139, %141 : vector<8x64xf32>
    %cst_68 = arith.constant dense<0.000000e+00> : vector<8xf32>
    %143 = vector.multi_reduction <add>, %142, %cst_68 [1] : vector<8x64xf32> to vector<8xf32>
    %144 = vector.shape_cast %143 : vector<8xf32> to vector<8x1xf32>
    %c0_69 = arith.constant 0 : index
    %c0_70 = arith.constant 0 : index
    %145 = vector.load %arg22[%c0_69, %c0_70] : memref<1x1xf32, #tpu.memory_space<vmem>>, vector<1x1xf32>
    %146 = vector.broadcast %145 : vector<1x1xf32> to vector<8x1xf32>
    %147 = arith.addf %144, %146 : vector<8x1xf32>
    %148 = arith.negf %147 : vector<8x1xf32>
    %149 = math.exp %148 : vector<8x1xf32>
    %cst_71 = arith.constant 1.000000e+00 : f32
    %150 = vector.broadcast %cst_71 : f32 to vector<8x1xf32>
    %151 = arith.addf %150, %149 : vector<8x1xf32>
    %152 = arith.divf %150, %151 : vector<8x1xf32>
    %153 = vector.broadcast %152 : vector<8x1xf32> to vector<8x64xf32>
    %154 = arith.mulf %153, %35 : vector<8x64xf32>
    %cst_72 = arith.constant 1.000000e+00 : f32
    %155 = vector.broadcast %cst_72 : f32 to vector<8x1xf32>
    %156 = arith.subf %155, %152 : vector<8x1xf32>
    %157 = vector.broadcast %156 : vector<8x1xf32> to vector<8x64xf32>
    %158 = arith.mulf %157, %125 : vector<8x64xf32>
    %159 = arith.addf %154, %158 : vector<8x64xf32>
    %c0_73 = arith.constant 0 : index
    %c0_74 = arith.constant 0 : index
    %160 = vector.load %arg23[%c0_73, %c0_74] : memref<64x8xf32, #tpu.memory_space<vmem>>, vector<64x8xf32>
    %cst_75 = arith.constant dense<0.000000e+00> : vector<8x8xf32>
    %161 = tpu.matmul %159, %160, %cst_75 {dimension_numbers = #tpu.dot_dimension_numbers<[1], [0], [0], [1], [0, 0, 1, 1], [], []>} : vector<8x64xf32>, vector<64x8xf32>, vector<8x8xf32> -> vector<8x8xf32>
    %c0_76 = arith.constant 0 : index
    %c0_77 = arith.constant 0 : index
    %162 = vector.load %arg24[%c0_76, %c0_77] : memref<1x8xf32, #tpu.memory_space<vmem>>, vector<1x8xf32>
    %163 = vector.broadcast %162 : vector<1x8xf32> to vector<8x8xf32>
    %164 = arith.addf %161, %163 : vector<8x8xf32>
    %165 = tpu.iota {dimensions = array<i32: 1>} : vector<8x8xi32>
    %c4_i32 = arith.constant 4 : i32
    %166 = vector.broadcast %c4_i32 : i32 to vector<8x8xi32>
    %167 = arith.cmpi slt, %165, %166 : vector<8x8xi32>
    %168 = math.tanh %164 : vector<8x8xf32>
    %169 = arith.negf %164 : vector<8x8xf32>
    %170 = math.exp %169 : vector<8x8xf32>
    %cst_78 = arith.constant 1.000000e+00 : f32
    %171 = vector.broadcast %cst_78 : f32 to vector<8x8xf32>
    %172 = arith.addf %171, %170 : vector<8x8xf32>
    %173 = arith.divf %171, %172 : vector<8x8xf32>
    %cst_79 = arith.constant 0.689999997 : f32
    %174 = vector.broadcast %cst_79 : f32 to vector<8x8xf32>
    %175 = arith.mulf %173, %174 : vector<8x8xf32>
    %cst_80 = arith.constant 0.00999999977 : f32
    %176 = vector.broadcast %cst_80 : f32 to vector<8x8xf32>
    %177 = arith.addf %175, %176 : vector<8x8xf32>
    %178 = arith.select %167, %168, %177 : vector<8x8xi1>, vector<8x8xf32>
    %c0_81 = arith.constant 0 : index
    %c0_82 = arith.constant 0 : index
    %179 = vector.load %arg25[%c0_81, %c0_82] : memref<8x8xf32, #tpu.memory_space<vmem>>, vector<8x8xf32>
    tpu.vector_store %arg25[%c0_81, %c0_82], %178 {strides = array<i32>} : memref<8x8xf32, #tpu.memory_space<vmem>>, vector<8x8xf32>,
    return
  }
  func.func @transform_0(%arg0: i32) -> (i32, i32) {
    %c0_i32 = arith.constant 0 : i32
    %c0_i32_0 = arith.constant 0 : i32
    return %arg0, %c0_i32 : i32, i32
  }
  func.func @transform_1(%arg0: i32) -> (i32, i32) {
    %c0_i32 = arith.constant 0 : i32
    %c0_i32_0 = arith.constant 0 : i32
    %c0_i32_1 = arith.constant 0 : i32
    return %c0_i32, %c0_i32_0 : i32, i32
  }
  func.func @transform_2(%arg0: i32) -> (i32, i32) {
    %c0_i32 = arith.constant 0 : i32
    %c0_i32_0 = arith.constant 0 : i32
    %c0_i32_1 = arith.constant 0 : i32
    return %c0_i32, %c0_i32_0 : i32, i32
  }
  func.func @transform_3(%arg0: i32) -> (i32, i32) {
    %c0_i32 = arith.constant 0 : i32
    %c0_i32_0 = arith.constant 0 : i32
    %c0_i32_1 = arith.constant 0 : i32
    return %c0_i32, %c0_i32_0 : i32, i32
  }
  func.func @transform_4(%arg0: i32) -> (i32, i32) {
    %c0_i32 = arith.constant 0 : i32
    %c0_i32_0 = arith.constant 0 : i32
    %c0_i32_1 = arith.constant 0 : i32
    return %c0_i32, %c0_i32_0 : i32, i32
  }
  func.func @transform_5(%arg0: i32) -> (i32, i32) {
    %c0_i32 = arith.constant 0 : i32
    %c0_i32_0 = arith.constant 0 : i32
    %c0_i32_1 = arith.constant 0 : i32
    return %c0_i32, %c0_i32_0 : i32, i32
  }
  func.func @transform_6(%arg0: i32) -> (i32, i32) {
    %c0_i32 = arith.constant 0 : i32
    %c0_i32_0 = arith.constant 0 : i32
    %c0_i32_1 = arith.constant 0 : i32
    return %c0_i32, %c0_i32_0 : i32, i32
  }
  func.func @transform_7(%arg0: i32) -> (i32, i32) {
    %c0_i32 = arith.constant 0 : i32
    %c0_i32_0 = arith.constant 0 : i32
    %c0_i32_1 = arith.constant 0 : i32
    return %c0_i32, %c0_i32_0 : i32, i32
  }
  func.func @transform_8(%arg0: i32) -> (i32, i32) {
    %c0_i32 = arith.constant 0 : i32
    %c0_i32_0 = arith.constant 0 : i32
    %c0_i32_1 = arith.constant 0 : i32
    return %c0_i32, %c0_i32_0 : i32, i32
  }
  func.func @transform_9(%arg0: i32) -> (i32, i32) {
    %c0_i32 = arith.constant 0 : i32
    %c0_i32_0 = arith.constant 0 : i32
    %c0_i32_1 = arith.constant 0 : i32
    return %c0_i32, %c0_i32_0 : i32, i32
  }
  func.func @transform_10(%arg0: i32) -> (i32, i32) {
    %c0_i32 = arith.constant 0 : i32
    %c0_i32_0 = arith.constant 0 : i32
    %c0_i32_1 = arith.constant 0 : i32
    return %c0_i32, %c0_i32_0 : i32, i32
  }
  func.func @transform_11(%arg0: i32) -> (i32, i32) {
    %c0_i32 = arith.constant 0 : i32
    %c0_i32_0 = arith.constant 0 : i32
    %c0_i32_1 = arith.constant 0 : i32
    return %c0_i32, %c0_i32_0 : i32, i32
  }
  func.func @transform_12(%arg0: i32) -> (i32, i32) {
    %c0_i32 = arith.constant 0 : i32
    %c0_i32_0 = arith.constant 0 : i32
    %c0_i32_1 = arith.constant 0 : i32
    return %c0_i32, %c0_i32_0 : i32, i32
  }
  func.func @transform_13(%arg0: i32) -> (i32, i32) {
    %c0_i32 = arith.constant 0 : i32
    %c0_i32_0 = arith.constant 0 : i32
    %c0_i32_1 = arith.constant 0 : i32
    return %c0_i32, %c0_i32_0 : i32, i32
  }
  func.func @transform_14(%arg0: i32) -> (i32, i32) {
    %c0_i32 = arith.constant 0 : i32
    %c0_i32_0 = arith.constant 0 : i32
    %c0_i32_1 = arith.constant 0 : i32
    return %c0_i32, %c0_i32_0 : i32, i32
  }
  func.func @transform_15(%arg0: i32) -> (i32, i32) {
    %c0_i32 = arith.constant 0 : i32
    %c0_i32_0 = arith.constant 0 : i32
    %c0_i32_1 = arith.constant 0 : i32
    return %c0_i32, %c0_i32_0 : i32, i32
  }
  func.func @transform_16(%arg0: i32) -> (i32, i32) {
    %c0_i32 = arith.constant 0 : i32
    %c0_i32_0 = arith.constant 0 : i32
    %c0_i32_1 = arith.constant 0 : i32
    return %c0_i32, %c0_i32_0 : i32, i32
  }
  func.func @transform_17(%arg0: i32) -> (i32, i32) {
    %c0_i32 = arith.constant 0 : i32
    %c0_i32_0 = arith.constant 0 : i32
    %c0_i32_1 = arith.constant 0 : i32
    return %c0_i32, %c0_i32_0 : i32, i32
  }
  func.func @transform_18(%arg0: i32) -> (i32, i32) {
    %c0_i32 = arith.constant 0 : i32
    %c0_i32_0 = arith.constant 0 : i32
    %c0_i32_1 = arith.constant 0 : i32
    return %c0_i32, %c0_i32_0 : i32, i32
  }
  func.func @transform_19(%arg0: i32) -> (i32, i32) {
    %c0_i32 = arith.constant 0 : i32
    %c0_i32_0 = arith.constant 0 : i32
    %c0_i32_1 = arith.constant 0 : i32
    return %c0_i32, %c0_i32_0 : i32, i32
  }
  func.func @transform_20(%arg0: i32) -> (i32, i32) {
    %c0_i32 = arith.constant 0 : i32
    %c0_i32_0 = arith.constant 0 : i32
    %c0_i32_1 = arith.constant 0 : i32
    return %c0_i32, %c0_i32_0 : i32, i32
  }
  func.func @transform_21(%arg0: i32) -> (i32, i32) {
    %c0_i32 = arith.constant 0 : i32
    %c0_i32_0 = arith.constant 0 : i32
    %c0_i32_1 = arith.constant 0 : i32
    return %c0_i32, %c0_i32_0 : i32, i32
  }
  func.func @transform_22(%arg0: i32) -> (i32, i32) {
    %c0_i32 = arith.constant 0 : i32
    %c0_i32_0 = arith.constant 0 : i32
    %c0_i32_1 = arith.constant 0 : i32
    return %c0_i32, %c0_i32_0 : i32, i32
  }
  func.func @transform_23(%arg0: i32) -> (i32, i32) {
    %c0_i32 = arith.constant 0 : i32
    %c0_i32_0 = arith.constant 0 : i32
    %c0_i32_1 = arith.constant 0 : i32
    return %c0_i32, %c0_i32_0 : i32, i32
  }
  func.func @transform_24(%arg0: i32) -> (i32, i32) {
    %c0_i32 = arith.constant 0 : i32
    %c0_i32_0 = arith.constant 0 : i32
    return %arg0, %c0_i32 : i32, i32
  }
}

</mosaic_0001>

<llo_original>
// kernel: tpu_custom_call.1
$region0: #{tpu_custom_call.1}
  #allocation0 [shape = 'u32[]', space=smem, size = 0x4, offset = 0x4, fixed_abs, tag = 'smem constant byte address 0x4 - core index']
  #allocation1 [shape = 'u32[72,128]{1,0:T(1,128)}', space=vmem, size = 0x9000, scoped, tag = 'internal scratch']
  #allocation2 [shape = 'f32[1,1]{1,0:T(1,128)S(1)}', space=vmem, size = 0x200, scoped, tag = 'scoped memory for tpu_custom_call.1']
  %s0 = inlined_call_operand.vmem [shape: f32[8,80], index: 0, kind: input, shape index: {}]
  %s1 = inlined_call_operand.vmem [shape: f32[80,1216], index: 1, kind: input, shape index: {}]
  %s2 = inlined_call_operand.vmem [shape: f32[1,1152], index: 2, kind: input, shape index: {}]
  %s3 = inlined_call_operand.vmem [shape: f32[256,128], index: 3, kind: input, shape index: {}]
  %s4 = inlined_call_operand.vmem [shape: f32[1,128], index: 4, kind: input, shape index: {}]
  %s5 = inlined_call_operand.vmem [shape: f32[128,64], index: 5, kind: input, shape index: {}]
  %s6 = inlined_call_operand.vmem [shape: f32[1,64], index: 6, kind: input, shape index: {}]
  %s7 = inlined_call_operand.vmem [shape: f32[256,128], index: 7, kind: input, shape index: {}]
  %s8 = inlined_call_operand.vmem [shape: f32[256,128], index: 8, kind: input, shape index: {}]
  %s9 = inlined_call_operand.hbm [shape: f32[256,128], index: 9, kind: input, shape index: {}]
  %s10 = inlined_call_operand.vmem [shape: f32[1,384], index: 10, kind: input, shape index: {}]
  %s11 = inlined_call_operand.vmem [shape: f32[384,192], index: 11, kind: input, shape index: {}]
  %s12 = inlined_call_operand.vmem [shape: f32[1,192], index: 12, kind: input, shape index: {}]
  %s13 = inlined_call_operand.vmem [shape: f32[128,64], index: 13, kind: input, shape index: {}]
  %s14 = inlined_call_operand.vmem [shape: f32[1,64], index: 14, kind: input, shape index: {}]
  %s15 = inlined_call_operand.vmem [shape: f32[3,64], index: 15, kind: input, shape index: {}]
  %s16 = inlined_call_operand.vmem [shape: f32[1,3], index: 16, kind: input, shape index: {}]
  %s17 = inlined_call_operand.vmem [shape: f32[64,64], index: 17, kind: input, shape index: {}]
  %s18 = inlined_call_operand.hbm [shape: f32[64,64], index: 18, kind: input, shape index: {}]
  %s19 = inlined_call_operand.vmem [shape: f32[1,64], index: 19, kind: input, shape index: {}]
  %s20 = inlined_call_operand.vmem [shape: f32[1,64], index: 20, kind: input, shape index: {}]
  %s21 = inlined_call_operand.<no memory space> [shape: f32[1,1], index: 21, kind: input, shape index: {}]
  %s22 = inlined_call_operand.vmem [shape: f32[64,8], index: 22, kind: input, shape index: {}]
  %s23 = inlined_call_operand.vmem [shape: f32[1,8], index: 23, kind: input, shape index: {}]
  %s24 = inlined_call_operand.hbm [shape: f32[8,8], index: 24, kind: output, shape index: {}]
  %s25 = sld [smem:[#allocation0]]
  $region114: #{tpu_custom_call.1} parent=0
    _
  %s27 = ssub.s32 1, %s25
  %s28 = scalar_select 0, %s27, %s25
  %v29 = vstv %s21
  %30 = vst [vmem:[#allocation2] sm:$0x1] %v29
  $region1: #{tpu_custom_call.1} parent=0
    #allocation3 [shape = 'u8[131072]{0}', space=vmem, size = 0x20000, scoped, tag = 'input window, operand 9, single buffered']
    #allocation4 [shape = 's32[1]{0}', space=sflag, size = 0x4, scoped, tag = 'scoped memory for tpu_custom_call.1']
    #allocation5 [shape = 's32[1]{0}', space=sflag, size = 0x4, scoped, tag = 'scoped memory for tpu_custom_call.1']
    #allocation6 [shape = 'u8[32768]{0}', space=vmem, size = 0x8000, scoped, tag = 'input window, operand 18, single buffered']
    #allocation7 [shape = 's32[1]{0}', space=sflag, size = 0x4, scoped, tag = 'scoped memory for tpu_custom_call.1']
    #allocation8 [shape = 'u8[4096]{0}', space=vmem, size = 0x1000, scoped, tag = 'output window, operand 0, single buffered']
    %31 = vsyncpa [#allocation4], 0
    %32 = vsyncpa [#allocation7], 0
    %33 = vsyncpa [#allocation5], 0
    // Predicated region
    $region2: #{tpu_custom_call.1} parent=1 // pred_check
      _
    $region3: #{tpu_custom_call.1} parent=1 // pred_check_branch
      %35 = sbr.rel (0) target = $region5
    $region4: #{tpu_custom_call.1} parent=1 // pred_region
      _
    $region5: #{tpu_custom_call.1} parent=1 // pred_fallthru
      _
    // Predicated region
    $region6: #{tpu_custom_call.1} parent=1 // pred_check
      _
    $region7: #{tpu_custom_call.1} parent=1 // pred_check_branch
      %37 = sbr.rel (0) target = $region9
    $region8: #{tpu_custom_call.1} parent=1 // pred_region
      _
    $region9: #{tpu_custom_call.1} parent=1 // pred_fallthru
      _
    // Predicated region
    $region10: #{tpu_custom_call.1} parent=1 // pred_check
      _
    $region11: #{tpu_custom_call.1} parent=1 // pred_check_branch
      %39 = sbr.rel (0) target = $region13
    $region12: #{tpu_custom_call.1} parent=1 // pred_region
      _
    $region13: #{tpu_custom_call.1} parent=1 // pred_fallthru
      _
    // Predicated region
    $region14: #{tpu_custom_call.1} parent=1 // pred_check
      _
    $region15: #{tpu_custom_call.1} parent=1 // pred_check_branch
      %41 = sbr.rel (0) target = $region17
    $region16: #{tpu_custom_call.1} parent=1 // pred_region
      _
    $region17: #{tpu_custom_call.1} parent=1 // pred_fallthru
      _
    // Predicated region
    $region18: #{tpu_custom_call.1} parent=1 // pred_check
      _
    $region19: #{tpu_custom_call.1} parent=1 // pred_check_branch
      %43 = sbr.rel (0) target = $region21
    $region20: #{tpu_custom_call.1} parent=1 // pred_region
      _
    $region21: #{tpu_custom_call.1} parent=1 // pred_fallthru
      _
    // Predicated region
    $region22: #{tpu_custom_call.1} parent=1 // pred_check
      _
    $region23: #{tpu_custom_call.1} parent=1 // pred_check_branch
      %45 = sbr.rel (0) target = $region25
    $region24: #{tpu_custom_call.1} parent=1 // pred_region
      _
    $region25: #{tpu_custom_call.1} parent=1 // pred_fallthru
      _
    // Predicated region
    $region26: #{tpu_custom_call.1} parent=1 // pred_check
      _
    $region27: #{tpu_custom_call.1} parent=1 // pred_check_branch
      %47 = sbr.rel (0) target = $region29
    $region28: #{tpu_custom_call.1} parent=1 // pred_region
      _
    $region29: #{tpu_custom_call.1} parent=1 // pred_fallthru
      _
    // Predicated region
    $region30: #{tpu_custom_call.1} parent=1 // pred_check
      _
    $region31: #{tpu_custom_call.1} parent=1 // pred_check_branch
      %49 = sbr.rel (0) target = $region33
    $region32: #{tpu_custom_call.1} parent=1 // pred_region
      _
    $region33: #{tpu_custom_call.1} parent=1 // pred_fallthru
      _
    // Predicated region
    $region34: #{tpu_custom_call.1} parent=1 // pred_check
      _
    $region35: #{tpu_custom_call.1} parent=1 // pred_check_branch
      %51 = sbr.rel (0) target = $region37
    $region36: #{tpu_custom_call.1} parent=1 // pred_region
      _
    $region37: #{tpu_custom_call.1} parent=1 // pred_fallthru
      _
    // Predicated region
    $region38: #{tpu_custom_call.1} parent=1 // pred_check
      _
    $region39: #{tpu_custom_call.1} parent=1 // pred_check_branch
      %53 = sbr.rel (0) target = $region41
    $region40: #{tpu_custom_call.1} parent=1 // pred_region
      %55 = vsyncadd [#allocation4], 0
      %s56 = sshll.u32 %s9, 4
      %s57 = int_to_ptr.hbm [resolvable:$true] %s56
      %s58 = sshll.u32 [#allocation3], 4
      %s59 = int_to_ptr.vmem [resolvable:$true] %s58
      %64 = dma.hbm_to_vmem [thread:$0]  %s57, 4096, %s59, [#allocation4], 128, 128, 8
    $region41: #{tpu_custom_call.1} parent=1 // pred_fallthru
      _
    // Predicated region
    $region42: #{tpu_custom_call.1} parent=1 // pred_check
      _
    $region43: #{tpu_custom_call.1} parent=1 // pred_check_branch
      %66 = sbr.rel (0) target = $region45
    $region44: #{tpu_custom_call.1} parent=1 // pred_region
      _
    $region45: #{tpu_custom_call.1} parent=1 // pred_fallthru
      _
    // Predicated region
    $region46: #{tpu_custom_call.1} parent=1 // pred_check
      _
    $region47: #{tpu_custom_call.1} parent=1 // pred_check_branch
      %68 = sbr.rel (0) target = $region49
    $region48: #{tpu_custom_call.1} parent=1 // pred_region
      _
    $region49: #{tpu_custom_call.1} parent=1 // pred_fallthru
      _
    // Predicated region
    $region50: #{tpu_custom_call.1} parent=1 // pred_check
      _
    $region51: #{tpu_custom_call.1} parent=1 // pred_check_branch
      %70 = sbr.rel (0) target = $region53
    $region52: #{tpu_custom_call.1} parent=1 // pred_region
      _
    $region53: #{tpu_custom_call.1} parent=1 // pred_fallthru
      _
    // Predicated region
    $region54: #{tpu_custom_call.1} parent=1 // pred_check
      _
    $region55: #{tpu_custom_call.1} parent=1 // pred_check_branch
      %72 = sbr.rel (0) target = $region57
    $region56: #{tpu_custom_call.1} parent=1 // pred_region
      _
    $region57: #{tpu_custom_call.1} parent=1 // pred_fallthru
      _
    // Predicated region
    $region58: #{tpu_custom_call.1} parent=1 // pred_check
      _
    $region59: #{tpu_custom_call.1} parent=1 // pred_check_branch
      %74 = sbr.rel (0) target = $region61
    $region60: #{tpu_custom_call.1} parent=1 // pred_region
      _
    $region61: #{tpu_custom_call.1} parent=1 // pred_fallthru
      _
    // Predicated region
    $region62: #{tpu_custom_call.1} parent=1 // pred_check
      _
    $region63: #{tpu_custom_call.1} parent=1 // pred_check_branch
      %76 = sbr.rel (0) target = $region65
    $region64: #{tpu_custom_call.1} parent=1 // pred_region
      _
    $region65: #{tpu_custom_call.1} parent=1 // pred_fallthru
      _
    // Predicated region
    $region66: #{tpu_custom_call.1} parent=1 // pred_check
      _
    $region67: #{tpu_custom_call.1} parent=1 // pred_check_branch
      %78 = sbr.rel (0) target = $region69
    $region68: #{tpu_custom_call.1} parent=1 // pred_region
      _
    $region69: #{tpu_custom_call.1} parent=1 // pred_fallthru
      _
    // Predicated region
    $region70: #{tpu_custom_call.1} parent=1 // pred_check
      _
    $region71: #{tpu_custom_call.1} parent=1 // pred_check_branch
      %80 = sbr.rel (0) target = $region73
    $region72: #{tpu_custom_call.1} parent=1 // pred_region
      _
    $region73: #{tpu_custom_call.1} parent=1 // pred_fallthru
      _
    // Predicated region
    $region74: #{tpu_custom_call.1} parent=1 // pred_check
      _
    $region75: #{tpu_custom_call.1} parent=1 // pred_check_branch
      %82 = sbr.rel (0) target = $region77
    $region76: #{tpu_custom_call.1} parent=1 // pred_region
      %84 = vsyncadd [#allocation7], 0
      %s85 = sshll.u32 %s18, 4
      %s86 = int_to_ptr.hbm [resolvable:$true] %s85
      %s87 = sshll.u32 [#allocation6], 4
      %s88 = int_to_ptr.vmem [resolvable:$true] %s87
      %93 = dma.hbm_to_vmem [thread:$0]  %s86, 1024, %s88, [#allocation7], 128, 128, 8
    $region77: #{tpu_custom_call.1} parent=1 // pred_fallthru
      _
    // Predicated region
    $region78: #{tpu_custom_call.1} parent=1 // pred_check
      _
    $region79: #{tpu_custom_call.1} parent=1 // pred_check_branch
      %95 = sbr.rel (0) target = $region81
    $region80: #{tpu_custom_call.1} parent=1 // pred_region
      _
    $region81: #{tpu_custom_call.1} parent=1 // pred_fallthru
      _
    // Predicated region
    $region82: #{tpu_custom_call.1} parent=1 // pred_check
      _
    $region83: #{tpu_custom_call.1} parent=1 // pred_check_branch
      %97 = sbr.rel (0) target = $region85
    $region84: #{tpu_custom_call.1} parent=1 // pred_region
      _
    $region85: #{tpu_custom_call.1} parent=1 // pred_fallthru
      _
    // Predicated region
    $region86: #{tpu_custom_call.1} parent=1 // pred_check
      _
    $region87: #{tpu_custom_call.1} parent=1 // pred_check_branch
      %99 = sbr.rel (0) target = $region89
    $region88: #{tpu_custom_call.1} parent=1 // pred_region
      _
    $region89: #{tpu_custom_call.1} parent=1 // pred_fallthru
      _
    // Predicated region
    $region90: #{tpu_custom_call.1} parent=1 // pred_check
      _
    $region91: #{tpu_custom_call.1} parent=1 // pred_check_branch
      %101 = sbr.rel (0) target = $region93
    $region92: #{tpu_custom_call.1} parent=1 // pred_region
      _
    $region93: #{tpu_custom_call.1} parent=1 // pred_fallthru
      _
    // Predicated region
    $region94: #{tpu_custom_call.1} parent=1 // pred_check
      _
    $region95: #{tpu_custom_call.1} parent=1 // pred_check_branch
      %103 = sbr.rel (0) target = $region97
    $region96: #{tpu_custom_call.1} parent=1 // pred_region
      _
    $region97: #{tpu_custom_call.1} parent=1 // pred_fallthru
      _
    // Predicated region
    $region98: #{tpu_custom_call.1} parent=1 // pred_check
      _
    $region99: #{tpu_custom_call.1} parent=1 // pred_check_branch
      %105 = sbr.rel (0) target = $region101
    $region100: #{tpu_custom_call.1} parent=1 // pred_region
      %107 = dma.done [#allocation4], 4096
    $region101: #{tpu_custom_call.1} parent=1 // pred_fallthru
      _
    // Predicated region
    $region102: #{tpu_custom_call.1} parent=1 // pred_check
      _
    $region103: #{tpu_custom_call.1} parent=1 // pred_check_branch
      %109 = sbr.rel (0) target = $region105
    $region104: #{tpu_custom_call.1} parent=1 // pred_region
      %111 = dma.done [#allocation7], 1024
    $region105: #{tpu_custom_call.1} parent=1 // pred_fallthru
      _
    %v112 = vld [vmem:[%s0] sm:$0xff]
    %v113 = vld [vmem:[%s1] sm:$0xff]
    %v114 = vld [vmem:[%s1 + $0x8] sm:$0xff]
    %v115 = vld [vmem:[%s1 + $0x10] sm:$0xff]
    %v116 = vld [vmem:[%s1 + $0x18] sm:$0xff]
    %v117 = vld [vmem:[%s1 + $0x20] sm:$0xff]
    %v118 = vld [vmem:[%s1 + $0x28] sm:$0xff]
    %v119 = vld [vmem:[%s1 + $0x30] sm:$0xff]
    %v120 = vld [vmem:[%s1 + $0x38] sm:$0xff]
    %v121 = vld [vmem:[%s1 + $0x40] sm:$0xff]
    %v122 = vld [vmem:[%s1 + $0x48] sm:$0xff]
    %v123 = vld [vmem:[%s1 + $0x50] sm:$0xff]
    %v124 = vld [vmem:[%s1 + $0x58] sm:$0xff]
    %v125 = vld [vmem:[%s1 + $0x60] sm:$0xff]
    %v126 = vld [vmem:[%s1 + $0x68] sm:$0xff]
    %v127 = vld [vmem:[%s1 + $0x70] sm:$0xff]
    %v128 = vld [vmem:[%s1 + $0x78] sm:$0xff]
    %v129 = vld [vmem:[%s1 + $0x80] sm:$0xff]
    %v130 = vld [vmem:[%s1 + $0x88] sm:$0xff]
    %v131 = vld [vmem:[%s1 + $0x90] sm:$0xff]
    %v132 = vld [vmem:[%s1 + $0x98] sm:$0xff]
    %v133 = vld [vmem:[%s1 + $0xa0] sm:$0xff]
    %v134 = vld [vmem:[%s1 + $0xa8] sm:$0xff]
    %v135 = vld [vmem:[%s1 + $0xb0] sm:$0xff]
    %v136 = vld [vmem:[%s1 + $0xb8] sm:$0xff]
    %v137 = vld [vmem:[%s1 + $0xc0] sm:$0xff]
    %v138 = vld [vmem:[%s1 + $0xc8] sm:$0xff]
    %v139 = vld [vmem:[%s1 + $0xd0] sm:$0xff]
    %v140 = vld [vmem:[%s1 + $0xd8] sm:$0xff]
    %v141 = vld [vmem:[%s1 + $0xe0] sm:$0xff]
    %v142 = vld [vmem:[%s1 + $0xe8] sm:$0xff]
    %v143 = vld [vmem:[%s1 + $0xf0] sm:$0xff]
    %v144 = vld [vmem:[%s1 + $0xf8] sm:$0xff]
    %v145 = vld [vmem:[%s1 + $0x100] sm:$0xff]
    %v146 = vld [vmem:[%s1 + $0x108] sm:$0xff]
    %v147 = vld [vmem:[%s1 + $0x110] sm:$0xff]
    %v148 = vld [vmem:[%s1 + $0x118] sm:$0xff]
    %v149 = vld [vmem:[%s1 + $0x120] sm:$0xff]
    %v150 = vld [vmem:[%s1 + $0x128] sm:$0xff]
    %v151 = vld [vmem:[%s1 + $0x130] sm:$0xff]
    %v152 = vld [vmem:[%s1 + $0x138] sm:$0xff]
    %v153 = vld [vmem:[%s1 + $0x140] sm:$0xff]
    %v154 = vld [vmem:[%s1 + $0x148] sm:$0xff]
    %v155 = vld [vmem:[%s1 + $0x150] sm:$0xff]
    %v156 = vld [vmem:[%s1 + $0x158] sm:$0xff]
    %v157 = vld [vmem:[%s1 + $0x160] sm:$0xff]
    %v158 = vld [vmem:[%s1 + $0x168] sm:$0xff]
    %v159 = vld [vmem:[%s1 + $0x170] sm:$0xff]
    %v160 = vld [vmem:[%s1 + $0x178] sm:$0xff]
    %v161 = vld [vmem:[%s1 + $0x180] sm:$0xff]
    %v162 = vld [vmem:[%s1 + $0x188] sm:$0xff]
    %v163 = vld [vmem:[%s1 + $0x190] sm:$0xff]
    %v164 = vld [vmem:[%s1 + $0x198] sm:$0xff]
    %v165 = vld [vmem:[%s1 + $0x1a0] sm:$0xff]
    %v166 = vld [vmem:[%s1 + $0x1a8] sm:$0xff]
    %v167 = vld [vmem:[%s1 + $0x1b0] sm:$0xff]
    %v168 = vld [vmem:[%s1 + $0x1b8] sm:$0xff]
    %v169 = vld [vmem:[%s1 + $0x1c0] sm:$0xff]
    %v170 = vld [vmem:[%s1 + $0x1c8] sm:$0xff]
    %v171 = vld [vmem:[%s1 + $0x1d0] sm:$0xff]
    %v172 = vld [vmem:[%s1 + $0x1d8] sm:$0xff]
    %v173 = vld [vmem:[%s1 + $0x1e0] sm:$0xff]
    %v174 = vld [vmem:[%s1 + $0x1e8] sm:$0xff]
    %v175 = vld [vmem:[%s1 + $0x1f0] sm:$0xff]
    %v176 = vld [vmem:[%s1 + $0x1f8] sm:$0xff]
    %v177 = vld [vmem:[%s1 + $0x200] sm:$0xff]
    %v178 = vld [vmem:[%s1 + $0x208] sm:$0xff]
    %v179 = vld [vmem:[%s1 + $0x210] sm:$0xff]
    %v180 = vld [vmem:[%s1 + $0x218] sm:$0xff]
    %v181 = vld [vmem:[%s1 + $0x220] sm:$0xff]
    %v182 = vld [vmem:[%s1 + $0x228] sm:$0xff]
    %v183 = vld [vmem:[%s1 + $0x230] sm:$0xff]
    %v184 = vld [vmem:[%s1 + $0x238] sm:$0xff]
    %v185 = vld [vmem:[%s1 + $0x240] sm:$0xff]
    %v186 = vld [vmem:[%s1 + $0x248] sm:$0xff]
    %v187 = vld [vmem:[%s1 + $0x250] sm:$0xff]
    %v188 = vld [vmem:[%s1 + $0x258] sm:$0xff]
    %v189 = vld [vmem:[%s1 + $0x260] sm:$0xff]
    %v190 = vld [vmem:[%s1 + $0x268] sm:$0xff]
    %v191 = vld [vmem:[%s1 + $0x270] sm:$0xff]
    %v192 = vld [vmem:[%s1 + $0x278] sm:$0xff]
    %v193 = vld [vmem:[%s1 + $0x280] sm:$0xff]
    %v194 = vld [vmem:[%s1 + $0x288] sm:$0xff]
    %v195 = vld [vmem:[%s1 + $0x290] sm:$0xff]
    %v196 = vld [vmem:[%s1 + $0x298] sm:$0xff]
    %v197 = vld [vmem:[%s1 + $0x2a0] sm:$0xff]
    %v198 = vld [vmem:[%s1 + $0x2a8] sm:$0xff]
    %v199 = vld [vmem:[%s1 + $0x2b0] sm:$0xff]
    %v200 = vld [vmem:[%s1 + $0x2b8] sm:$0xff]
    %v201 = vld [vmem:[%s1 + $0x2c0] sm:$0xff]
    %v202 = vld [vmem:[%s1 + $0x2c8] sm:$0xff]
    %v203 = vld [vmem:[%s1 + $0x2d0] sm:$0xff]
    %v204 = vld [vmem:[%s1 + $0x2d8] sm:$0xff]
    %v205 = vld [vmem:[%s1 + $0x2e0] sm:$0xff]
    %v206 = vld [vmem:[%s1 + $0x2e8] sm:$0xff]
    %v207 = vld [vmem:[%s1 + $0x2f0] sm:$0xff]
    %v208 = vld [vmem:[%s1 + $0x2f8] sm:$0xff]
    %v209 = vld [vmem:[%s1 + $0x300] sm:$0xff]
    %v210 = vld [vmem:[%s1 + $0x308] sm:$0xff]
    %v211 = vld [vmem:[%s1 + $0x310] sm:$0xff]
    %v212 = vld [vmem:[%s1 + $0x318] sm:$0xff]
    %vm213 = vcmask 654336
    %v215 = vsel %vm213, %v112, 0
    %217 = vmatpush.msra.mxu0 0.0
    %218 = vmatpush.msra.mxu0 0.0
    %219 = vmatpush.msra.mxu0 0.0
    %220 = vmatpush.msra.mxu0 0.0
    %221 = vmatpush.msra.mxu0 0.0
    %222 = vmatpush.msra.mxu0 0.0
    %223 = vmatpush.msra.mxu0 %v203
    %224 = vmatpush.msra.mxu0 %v193
    %225 = vmatpush.msra.mxu0 %v183
    %226 = vmatpush.msra.mxu0 %v173
    %227 = vmatpush.msra.mxu0 %v163
    %228 = vmatpush.msra.mxu0 %v153
    %229 = vmatpush.msra.mxu0 %v143
    %230 = vmatpush.msra.mxu0 %v133
    %231 = vmatpush.msra.mxu0 %v123
    %232 = vmatpush.msra.mxu0 %v113
    %233 = vmatmul.f32.gmra.mxu0 %v215
    %v234 = vpop.f32.mrf.mxu0
    %v235 = vadd.f32 0.0, %v234
    %236 = vdwg.mxu0
    %237 = vmatpush.msra.mxu0 0.0
    %238 = vmatpush.msra.mxu0 0.0
    %239 = vmatpush.msra.mxu0 0.0
    %240 = vmatpush.msra.mxu0 0.0
    %241 = vmatpush.msra.mxu0 0.0
    %242 = vmatpush.msra.mxu0 0.0
    %243 = vmatpush.msra.mxu0 %v204
    %244 = vmatpush.msra.mxu0 %v194
    %245 = vmatpush.msra.mxu0 %v184
    %246 = vmatpush.msra.mxu0 %v174
    %247 = vmatpush.msra.mxu0 %v164
    %248 = vmatpush.msra.mxu0 %v154
    %249 = vmatpush.msra.mxu0 %v144
    %250 = vmatpush.msra.mxu0 %v134
    %251 = vmatpush.msra.mxu0 %v124
    %252 = vmatpush.msra.mxu0 %v114
    %253 = vmatmul.f32.gmra.mxu0 %v215
    %v254 = vpop.f32.mrf.mxu0
    %v255 = vadd.f32 0.0, %v254
    %256 = vdwg.mxu0
    %257 = vmatpush.msra.mxu0 0.0
    %258 = vmatpush.msra.mxu0 0.0
    %259 = vmatpush.msra.mxu0 0.0
    %260 = vmatpush.msra.mxu0 0.0
    %261 = vmatpush.msra.mxu0 0.0
    %262 = vmatpush.msra.mxu0 0.0
    %263 = vmatpush.msra.mxu0 %v205
    %264 = vmatpush.msra.mxu0 %v195
    %265 = vmatpush.msra.mxu0 %v185
    %266 = vmatpush.msra.mxu0 %v175
    %267 = vmatpush.msra.mxu0 %v165
    %268 = vmatpush.msra.mxu0 %v155
    %269 = vmatpush.msra.mxu0 %v145
    %270 = vmatpush.msra.mxu0 %v135
    %271 = vmatpush.msra.mxu0 %v125
    %272 = vmatpush.msra.mxu0 %v115
    %273 = vmatmul.f32.gmra.mxu0 %v215
    %v274 = vpop.f32.mrf.mxu0
    %v275 = vadd.f32 0.0, %v274
    %276 = vdwg.mxu0
    %277 = vmatpush.msra.mxu0 0.0
    %278 = vmatpush.msra.mxu0 0.0
    %279 = vmatpush.msra.mxu0 0.0
    %280 = vmatpush.msra.mxu0 0.0
    %281 = vmatpush.msra.mxu0 0.0
    %282 = vmatpush.msra.mxu0 0.0
    %283 = vmatpush.msra.mxu0 %v206
    %284 = vmatpush.msra.mxu0 %v196
    %285 = vmatpush.msra.mxu0 %v186
    %286 = vmatpush.msra.mxu0 %v176
    %287 = vmatpush.msra.mxu0 %v166
    %288 = vmatpush.msra.mxu0 %v156
    %289 = vmatpush.msra.mxu0 %v146
    %290 = vmatpush.msra.mxu0 %v136
    %291 = vmatpush.msra.mxu0 %v126
    %292 = vmatpush.msra.mxu0 %v116
    %293 = vmatmul.f32.gmra.mxu0 %v215
    %v294 = vpop.f32.mrf.mxu0
    %v295 = vadd.f32 0.0, %v294
    %296 = vdwg.mxu0
    %297 = vmatpush.msra.mxu0 0.0
    %298 = vmatpush.msra.mxu0 0.0
    %299 = vmatpush.msra.mxu0 0.0
    %300 = vmatpush.msra.mxu0 0.0
    %301 = vmatpush.msra.mxu0 0.0
    %302 = vmatpush.msra.mxu0 0.0
    %303 = vmatpush.msra.mxu0 %v207
    %304 = vmatpush.msra.mxu0 %v197
    %305 = vmatpush.msra.mxu0 %v187
    %306 = vmatpush.msra.mxu0 %v177
    %307 = vmatpush.msra.mxu0 %v167
    %308 = vmatpush.msra.mxu0 %v157
    %309 = vmatpush.msra.mxu0 %v147
    %310 = vmatpush.msra.mxu0 %v137
    %311 = vmatpush.msra.mxu0 %v127
    %312 = vmatpush.msra.mxu0 %v117
    %313 = vmatmul.f32.gmra.mxu0 %v215
    %v314 = vpop.f32.mrf.mxu0
    %v315 = vadd.f32 0.0, %v314
    %316 = vdwg.mxu0
    %317 = vmatpush.msra.mxu0 0.0
    %318 = vmatpush.msra.mxu0 0.0
    %319 = vmatpush.msra.mxu0 0.0
    %320 = vmatpush.msra.mxu0 0.0
    %321 = vmatpush.msra.mxu0 0.0
    %322 = vmatpush.msra.mxu0 0.0
    %323 = vmatpush.msra.mxu0 %v208
    %324 = vmatpush.msra.mxu0 %v198
    %325 = vmatpush.msra.mxu0 %v188
    %326 = vmatpush.msra.mxu0 %v178
    %327 = vmatpush.msra.mxu0 %v168
    %328 = vmatpush.msra.mxu0 %v158
    %329 = vmatpush.msra.mxu0 %v148
    %330 = vmatpush.msra.mxu0 %v138
    %331 = vmatpush.msra.mxu0 %v128
    %332 = vmatpush.msra.mxu0 %v118
    %333 = vmatmul.f32.gmra.mxu0 %v215
    %v334 = vpop.f32.mrf.mxu0
    %v335 = vadd.f32 0.0, %v334
    %336 = vdwg.mxu0
    %337 = vmatpush.msra.mxu0 0.0
    %338 = vmatpush.msra.mxu0 0.0
    %339 = vmatpush.msra.mxu0 0.0
    %340 = vmatpush.msra.mxu0 0.0
    %341 = vmatpush.msra.mxu0 0.0
    %342 = vmatpush.msra.mxu0 0.0
    %343 = vmatpush.msra.mxu0 %v209
    %344 = vmatpush.msra.mxu0 %v199
    %345 = vmatpush.msra.mxu0 %v189
    %346 = vmatpush.msra.mxu0 %v179
    %347 = vmatpush.msra.mxu0 %v169
    %348 = vmatpush.msra.mxu0 %v159
    %349 = vmatpush.msra.mxu0 %v149
    %350 = vmatpush.msra.mxu0 %v139
    %351 = vmatpush.msra.mxu0 %v129
    %352 = vmatpush.msra.mxu0 %v119
    %353 = vmatmul.f32.gmra.mxu0 %v215
    %v354 = vpop.f32.mrf.mxu0
    %v355 = vadd.f32 0.0, %v354
    %356 = vdwg.mxu0
    %357 = vmatpush.msra.mxu0 0.0
    %358 = vmatpush.msra.mxu0 0.0
    %359 = vmatpush.msra.mxu0 0.0
    %360 = vmatpush.msra.mxu0 0.0
    %361 = vmatpush.msra.mxu0 0.0
    %362 = vmatpush.msra.mxu0 0.0
    %363 = vmatpush.msra.mxu0 %v210
    %364 = vmatpush.msra.mxu0 %v200
    %365 = vmatpush.msra.mxu0 %v190
    %366 = vmatpush.msra.mxu0 %v180
    %367 = vmatpush.msra.mxu0 %v170
    %368 = vmatpush.msra.mxu0 %v160
    %369 = vmatpush.msra.mxu0 %v150
    %370 = vmatpush.msra.mxu0 %v140
    %371 = vmatpush.msra.mxu0 %v130
    %372 = vmatpush.msra.mxu0 %v120
    %373 = vmatmul.f32.gmra.mxu0 %v215
    %v374 = vpop.f32.mrf.mxu0
    %v375 = vadd.f32 0.0, %v374
    %376 = vdwg.mxu0
    %377 = vmatpush.msra.mxu0 0.0
    %378 = vmatpush.msra.mxu0 0.0
    %379 = vmatpush.msra.mxu0 0.0
    %380 = vmatpush.msra.mxu0 0.0
    %381 = vmatpush.msra.mxu0 0.0
    %382 = vmatpush.msra.mxu0 0.0
    %383 = vmatpush.msra.mxu0 %v211
    %384 = vmatpush.msra.mxu0 %v201
    %385 = vmatpush.msra.mxu0 %v191
    %386 = vmatpush.msra.mxu0 %v181
    %387 = vmatpush.msra.mxu0 %v171
    %388 = vmatpush.msra.mxu0 %v161
    %389 = vmatpush.msra.mxu0 %v151
    %390 = vmatpush.msra.mxu0 %v141
    %391 = vmatpush.msra.mxu0 %v131
    %392 = vmatpush.msra.mxu0 %v121
    %393 = vmatmul.f32.gmra.mxu0 %v215
    %v394 = vpop.f32.mrf.mxu0
    %v395 = vadd.f32 0.0, %v394
    %396 = vdwg.mxu0
    %397 = vmatpush.msra.mxu0 0.0
    %398 = vmatpush.msra.mxu0 0.0
    %399 = vmatpush.msra.mxu0 0.0
    %400 = vmatpush.msra.mxu0 0.0
    %401 = vmatpush.msra.mxu0 0.0
    %402 = vmatpush.msra.mxu0 0.0
    %403 = vmatpush.msra.mxu0 %v212
    %404 = vmatpush.msra.mxu0 %v202
    %405 = vmatpush.msra.mxu0 %v192
    %406 = vmatpush.msra.mxu0 %v182
    %407 = vmatpush.msra.mxu0 %v172
    %408 = vmatpush.msra.mxu0 %v162
    %409 = vmatpush.msra.mxu0 %v152
    %410 = vmatpush.msra.mxu0 %v142
    %411 = vmatpush.msra.mxu0 %v132
    %412 = vmatpush.msra.mxu0 %v122
    %413 = vmatmul.f32.gmra.mxu0 %v215
    %v414 = vpop.f32.mrf.mxu0
    %v415 = vadd.f32 0.0, %v414
    %416 = vdwg.mxu0
    %v417 = vld [vmem:[%s2] sm:$0xff]
    %v418 = vld [vmem:[%s2 + $0x8] sm:$0x1]
    %v421 = vperm.slane %v417, 0
    %v422 = vperm.slane %v417, 1
    %v423 = vperm.slane %v417, 2
    %v424 = vperm.slane %v417, 3
    %v425 = vperm.slane %v417, 4
    %v426 = vperm.slane %v417, 5
    %v427 = vperm.slane %v417, 6
    %v428 = vperm.slane %v417, 7
    %v429 = vperm.slane %v418, 0
    %v439 = vadd.f32 %v235, %v421
    %v440 = vadd.f32 %v255, %v422
    %v441 = vadd.f32 %v275, %v423
    %v442 = vadd.f32 %v295, %v424
    %v443 = vadd.f32 %v315, %v425
    %v444 = vadd.f32 %v335, %v426
    %v445 = vadd.f32 %v355, %v427
    %v446 = vadd.f32 %v375, %v428
    %v447 = vadd.f32 %v395, %v429
    %vm448 = vcmp.gt.f32.partialorder %v439, 0.0
    %vm449 = vcmp.gt.f32.partialorder %v440, 0.0
    %vm450 = vcmp.gt.f32.partialorder %v441, 0.0
    %vm451 = vcmp.gt.f32.partialorder %v442, 0.0
    %vm452 = vcmp.gt.f32.partialorder %v443, 0.0
    %vm453 = vcmp.gt.f32.partialorder %v444, 0.0
    %vm454 = vcmp.gt.f32.partialorder %v445, 0.0
    %vm455 = vcmp.gt.f32.partialorder %v446, 0.0
    %vm456 = vcmp.gt.f32.partialorder %v447, 0.0
    %v457 = vmul.f32 %v439, 0.01
    %v458 = vmul.f32 %v440, 0.01
    %v459 = vmul.f32 %v441, 0.01
    %v460 = vmul.f32 %v442, 0.01
    %v461 = vmul.f32 %v443, 0.01
    %v462 = vmul.f32 %v444, 0.01
    %v463 = vmul.f32 %v445, 0.01
    %v464 = vmul.f32 %v446, 0.01
    %v465 = vmul.f32 %v447, 0.01
    %v466 = vsel %vm448, %v439, %v457
    %v467 = vsel %vm449, %v440, %v458
    %v468 = vsel %vm450, %v441, %v459
    %v469 = vsel %vm451, %v442, %v460
    %v470 = vsel %vm452, %v443, %v461
    %v471 = vsel %vm453, %v444, %v462
    %v472 = vsel %vm454, %v445, %v463
    %v473 = vsel %vm455, %v446, %v464
    %v474 = vsel %vm456, %v447, %v465
    %v475 = vld [vmem:[%s3] sm:$0xff]
    %v476 = vld [vmem:[%s3 + $0x8] sm:$0xff]
    %v477 = vld [vmem:[%s3 + $0x10] sm:$0xff]
    %v478 = vld [vmem:[%s3 + $0x18] sm:$0xff]
    %v479 = vld [vmem:[%s3 + $0x20] sm:$0xff]
    %v480 = vld [vmem:[%s3 + $0x28] sm:$0xff]
    %v481 = vld [vmem:[%s3 + $0x30] sm:$0xff]
    %v482 = vld [vmem:[%s3 + $0x38] sm:$0xff]
    %v483 = vld [vmem:[%s3 + $0x40] sm:$0xff]
    %v484 = vld [vmem:[%s3 + $0x48] sm:$0xff]
    %v485 = vld [vmem:[%s3 + $0x50] sm:$0xff]
    %v486 = vld [vmem:[%s3 + $0x58] sm:$0xff]
    %v487 = vld [vmem:[%s3 + $0x60] sm:$0xff]
    %v488 = vld [vmem:[%s3 + $0x68] sm:$0xff]
    %v489 = vld [vmem:[%s3 + $0x70] sm:$0xff]
    %v490 = vld [vmem:[%s3 + $0x78] sm:$0xff]
    %v491 = vld [vmem:[%s3 + $0x80] sm:$0xff]
    %v492 = vld [vmem:[%s3 + $0x88] sm:$0xff]
    %v493 = vld [vmem:[%s3 + $0x90] sm:$0xff]
    %v494 = vld [vmem:[%s3 + $0x98] sm:$0xff]
    %v495 = vld [vmem:[%s3 + $0xa0] sm:$0xff]
    %v496 = vld [vmem:[%s3 + $0xa8] sm:$0xff]
    %v497 = vld [vmem:[%s3 + $0xb0] sm:$0xff]
    %v498 = vld [vmem:[%s3 + $0xb8] sm:$0xff]
    %v499 = vld [vmem:[%s3 + $0xc0] sm:$0xff]
    %v500 = vld [vmem:[%s3 + $0xc8] sm:$0xff]
    %v501 = vld [vmem:[%s3 + $0xd0] sm:$0xff]
    %v502 = vld [vmem:[%s3 + $0xd8] sm:$0xff]
    %v503 = vld [vmem:[%s3 + $0xe0] sm:$0xff]
    %v504 = vld [vmem:[%s3 + $0xe8] sm:$0xff]
    %v505 = vld [vmem:[%s3 + $0xf0] sm:$0xff]
    %v506 = vld [vmem:[%s3 + $0xf8] sm:$0xff]
    %v507 = vld [vmem:[%s4] sm:$0x1]
    %v509 = vperm.slane %v507, 0
    %511 = vmatpush.msra.mxu0 %v490
    %512 = vmatpush.msra.mxu0 %v489
    %513 = vmatpush.msra.mxu0 %v488
    %514 = vmatpush.msra.mxu0 %v487
    %515 = vmatpush.msra.mxu0 %v486
    %516 = vmatpush.msra.mxu0 %v485
    %517 = vmatpush.msra.mxu0 %v484
    %518 = vmatpush.msra.mxu0 %v483
    %519 = vmatpush.msra.mxu0 %v482
    %520 = vmatpush.msra.mxu0 %v481
    %521 = vmatpush.msra.mxu0 %v480
    %522 = vmatpush.msra.mxu0 %v479
    %523 = vmatpush.msra.mxu0 %v478
    %524 = vmatpush.msra.mxu0 %v477
    %525 = vmatpush.msra.mxu0 %v476
    %526 = vmatpush.msra.mxu0 %v475
    %527 = vmatmul.f32.gmra.mxu0 %v466
    %v528 = vpop.f32.mrf.mxu0
    %v529 = vadd.f32 %v509, %v528
    %530 = vdwg.mxu0
    %531 = vmatpush.msra.mxu0 %v506
    %532 = vmatpush.msra.mxu0 %v505
    %533 = vmatpush.msra.mxu0 %v504
    %534 = vmatpush.msra.mxu0 %v503
    %535 = vmatpush.msra.mxu0 %v502
    %536 = vmatpush.msra.mxu0 %v501
    %537 = vmatpush.msra.mxu0 %v500
    %538 = vmatpush.msra.mxu0 %v499
    %539 = vmatpush.msra.mxu0 %v498
    %540 = vmatpush.msra.mxu0 %v497
    %541 = vmatpush.msra.mxu0 %v496
    %542 = vmatpush.msra.mxu0 %v495
    %543 = vmatpush.msra.mxu0 %v494
    %544 = vmatpush.msra.mxu0 %v493
    %545 = vmatpush.msra.mxu0 %v492
    %546 = vmatpush.msra.mxu0 %v491
    %547 = vmatmul.f32.gmra.mxu0 %v467
    %v548 = vpop.f32.mrf.mxu0
    %v549 = vadd.f32 %v529, %v548
    %550 = vdwg.mxu0
    %vm551 = vcmp.gt.f32.partialorder %v549, 0.0
    %v552 = vmul.f32 %v549, 0.01
    %v553 = vsel %vm551, %v549, %v552
    %v554 = vld [vmem:[%s5] sm:$0xff]
    %v555 = vld [vmem:[%s5 + $0x8] sm:$0xff]
    %v556 = vld [vmem:[%s5 + $0x10] sm:$0xff]
    %v557 = vld [vmem:[%s5 + $0x18] sm:$0xff]
    %v558 = vld [vmem:[%s5 + $0x20] sm:$0xff]
    %v559 = vld [vmem:[%s5 + $0x28] sm:$0xff]
    %v560 = vld [vmem:[%s5 + $0x30] sm:$0xff]
    %v561 = vld [vmem:[%s5 + $0x38] sm:$0xff]
    %v562 = vld [vmem:[%s5 + $0x40] sm:$0xff]
    %v563 = vld [vmem:[%s5 + $0x48] sm:$0xff]
    %v564 = vld [vmem:[%s5 + $0x50] sm:$0xff]
    %v565 = vld [vmem:[%s5 + $0x58] sm:$0xff]
    %v566 = vld [vmem:[%s5 + $0x60] sm:$0xff]
    %v567 = vld [vmem:[%s5 + $0x68] sm:$0xff]
    %v568 = vld [vmem:[%s5 + $0x70] sm:$0xff]
    %v569 = vld [vmem:[%s5 + $0x78] sm:$0xff]
    %v570 = vld [vmem:[%s6] sm:$0x1]
    %v572 = vperm.slane %v570, 0
    %574 = vmatpush.msra.mxu0 %v569
    %575 = vmatpush.msra.mxu0 %v568
    %576 = vmatpush.msra.mxu0 %v567
    %577 = vmatpush.msra.mxu0 %v566
    %578 = vmatpush.msra.mxu0 %v565
    %579 = vmatpush.msra.mxu0 %v564
    %580 = vmatpush.msra.mxu0 %v563
    %581 = vmatpush.msra.mxu0 %v562
    %582 = vmatpush.msra.mxu0 %v561
    %583 = vmatpush.msra.mxu0 %v560
    %584 = vmatpush.msra.mxu0 %v559
    %585 = vmatpush.msra.mxu0 %v558
    %586 = vmatpush.msra.mxu0 %v557
    %587 = vmatpush.msra.mxu0 %v556
    %588 = vmatpush.msra.mxu0 %v555
    %589 = vmatpush.msra.mxu0 %v554
    %590 = vmatmul.f32.gmra.mxu0 %v553
    %v591 = vpop.f32.mrf.mxu0
    %v592 = vadd.f32 %v572, %v591
    %593 = vdwg.mxu0
    %vm594 = vcmp.gt.f32.partialorder %v592, 0.0
    %v595 = vmul.f32 %v592, 0.01
    %v596 = vsel %vm594, %v592, %v595
    %v597 = vld [vmem:[%s7] sm:$0xff]
    %v598 = vld [vmem:[%s7 + $0x8] sm:$0xff]
    %v599 = vld [vmem:[%s7 + $0x10] sm:$0xff]
    %v600 = vld [vmem:[%s7 + $0x18] sm:$0xff]
    %v601 = vld [vmem:[%s7 + $0x20] sm:$0xff]
    %v602 = vld [vmem:[%s7 + $0x28] sm:$0xff]
    %v603 = vld [vmem:[%s7 + $0x30] sm:$0xff]
    %v604 = vld [vmem:[%s7 + $0x38] sm:$0xff]
    %v605 = vld [vmem:[%s7 + $0x40] sm:$0xff]
    %v606 = vld [vmem:[%s7 + $0x48] sm:$0xff]
    %v607 = vld [vmem:[%s7 + $0x50] sm:$0xff]
    %v608 = vld [vmem:[%s7 + $0x58] sm:$0xff]
    %v609 = vld [vmem:[%s7 + $0x60] sm:$0xff]
    %v610 = vld [vmem:[%s7 + $0x68] sm:$0xff]
    %v611 = vld [vmem:[%s7 + $0x70] sm:$0xff]
    %v612 = vld [vmem:[%s7 + $0x78] sm:$0xff]
    %v613 = vld [vmem:[%s7 + $0x80] sm:$0xff]
    %v614 = vld [vmem:[%s7 + $0x88] sm:$0xff]
    %v615 = vld [vmem:[%s7 + $0x90] sm:$0xff]
    %v616 = vld [vmem:[%s7 + $0x98] sm:$0xff]
    %v617 = vld [vmem:[%s7 + $0xa0] sm:$0xff]
    %v618 = vld [vmem:[%s7 + $0xa8] sm:$0xff]
    %v619 = vld [vmem:[%s7 + $0xb0] sm:$0xff]
    %v620 = vld [vmem:[%s7 + $0xb8] sm:$0xff]
    %v621 = vld [vmem:[%s7 + $0xc0] sm:$0xff]
    %v622 = vld [vmem:[%s7 + $0xc8] sm:$0xff]
    %v623 = vld [vmem:[%s7 + $0xd0] sm:$0xff]
    %v624 = vld [vmem:[%s7 + $0xd8] sm:$0xff]
    %v625 = vld [vmem:[%s7 + $0xe0] sm:$0xff]
    %v626 = vld [vmem:[%s7 + $0xe8] sm:$0xff]
    %v627 = vld [vmem:[%s7 + $0xf0] sm:$0xff]
    %v628 = vld [vmem:[%s7 + $0xf8] sm:$0xff]
    %629 = vmatpush.msra.mxu0 %v612
    %630 = vmatpush.msra.mxu0 %v611
    %631 = vmatpush.msra.mxu0 %v610
    %632 = vmatpush.msra.mxu0 %v609
    %633 = vmatpush.msra.mxu0 %v608
    %634 = vmatpush.msra.mxu0 %v607
    %635 = vmatpush.msra.mxu0 %v606
    %636 = vmatpush.msra.mxu0 %v605
    %637 = vmatpush.msra.mxu0 %v604
    %638 = vmatpush.msra.mxu0 %v603
    %639 = vmatpush.msra.mxu0 %v602
    %640 = vmatpush.msra.mxu0 %v601
    %641 = vmatpush.msra.mxu0 %v600
    %642 = vmatpush.msra.mxu0 %v599
    %643 = vmatpush.msra.mxu0 %v598
    %644 = vmatpush.msra.mxu0 %v597
    %645 = vmatmul.f32.gmra.mxu0 %v468
    %v646 = vpop.f32.mrf.mxu0
    %v647 = vadd.f32 0.0, %v646
    %648 = vdwg.mxu0
    %649 = vmatpush.msra.mxu0 %v628
    %650 = vmatpush.msra.mxu0 %v627
    %651 = vmatpush.msra.mxu0 %v626
    %652 = vmatpush.msra.mxu0 %v625
    %653 = vmatpush.msra.mxu0 %v624
    %654 = vmatpush.msra.mxu0 %v623
    %655 = vmatpush.msra.mxu0 %v622
    %656 = vmatpush.msra.mxu0 %v621
    %657 = vmatpush.msra.mxu0 %v620
    %658 = vmatpush.msra.mxu0 %v619
    %659 = vmatpush.msra.mxu0 %v618
    %660 = vmatpush.msra.mxu0 %v617
    %661 = vmatpush.msra.mxu0 %v616
    %662 = vmatpush.msra.mxu0 %v615
    %663 = vmatpush.msra.mxu0 %v614
    %664 = vmatpush.msra.mxu0 %v613
    %665 = vmatmul.f32.gmra.mxu0 %v469
    %v666 = vpop.f32.mrf.mxu0
    %v667 = vadd.f32 %v647, %v666
    %668 = vdwg.mxu0
    %v669 = vld [vmem:[%s8] sm:$0xff]
    %v670 = vld [vmem:[%s8 + $0x8] sm:$0xff]
    %v671 = vld [vmem:[%s8 + $0x10] sm:$0xff]
    %v672 = vld [vmem:[%s8 + $0x18] sm:$0xff]
    %v673 = vld [vmem:[%s8 + $0x20] sm:$0xff]
    %v674 = vld [vmem:[%s8 + $0x28] sm:$0xff]
    %v675 = vld [vmem:[%s8 + $0x30] sm:$0xff]
    %v676 = vld [vmem:[%s8 + $0x38] sm:$0xff]
    %v677 = vld [vmem:[%s8 + $0x40] sm:$0xff]
    %v678 = vld [vmem:[%s8 + $0x48] sm:$0xff]
    %v679 = vld [vmem:[%s8 + $0x50] sm:$0xff]
    %v680 = vld [vmem:[%s8 + $0x58] sm:$0xff]
    %v681 = vld [vmem:[%s8 + $0x60] sm:$0xff]
    %v682 = vld [vmem:[%s8 + $0x68] sm:$0xff]
    %v683 = vld [vmem:[%s8 + $0x70] sm:$0xff]
    %v684 = vld [vmem:[%s8 + $0x78] sm:$0xff]
    %v685 = vld [vmem:[%s8 + $0x80] sm:$0xff]
    %v686 = vld [vmem:[%s8 + $0x88] sm:$0xff]
    %v687 = vld [vmem:[%s8 + $0x90] sm:$0xff]
    %v688 = vld [vmem:[%s8 + $0x98] sm:$0xff]
    %v689 = vld [vmem:[%s8 + $0xa0] sm:$0xff]
    %v690 = vld [vmem:[%s8 + $0xa8] sm:$0xff]
    %v691 = vld [vmem:[%s8 + $0xb0] sm:$0xff]
    %v692 = vld [vmem:[%s8 + $0xb8] sm:$0xff]
    %v693 = vld [vmem:[%s8 + $0xc0] sm:$0xff]
    %v694 = vld [vmem:[%s8 + $0xc8] sm:$0xff]
    %v695 = vld [vmem:[%s8 + $0xd0] sm:$0xff]
    %v696 = vld [vmem:[%s8 + $0xd8] sm:$0xff]
    %v697 = vld [vmem:[%s8 + $0xe0] sm:$0xff]
    %v698 = vld [vmem:[%s8 + $0xe8] sm:$0xff]
    %v699 = vld [vmem:[%s8 + $0xf0] sm:$0xff]
    %v700 = vld [vmem:[%s8 + $0xf8] sm:$0xff]
    %701 = vmatpush.msra.mxu0 %v684
    %702 = vmatpush.msra.mxu0 %v683
    %703 = vmatpush.msra.mxu0 %v682
    %704 = vmatpush.msra.mxu0 %v681
    %705 = vmatpush.msra.mxu0 %v680
    %706 = vmatpush.msra.mxu0 %v679
    %707 = vmatpush.msra.mxu0 %v678
    %708 = vmatpush.msra.mxu0 %v677
    %709 = vmatpush.msra.mxu0 %v676
    %710 = vmatpush.msra.mxu0 %v675
    %711 = vmatpush.msra.mxu0 %v674
    %712 = vmatpush.msra.mxu0 %v673
    %713 = vmatpush.msra.mxu0 %v672
    %714 = vmatpush.msra.mxu0 %v671
    %715 = vmatpush.msra.mxu0 %v670
    %716 = vmatpush.msra.mxu0 %v669
    %717 = vmatmul.f32.gmra.mxu0 %v470
    %v718 = vpop.f32.mrf.mxu0
    %v719 = vadd.f32 0.0, %v718
    %720 = vdwg.mxu0
    %721 = vmatpush.msra.mxu0 %v700
    %722 = vmatpush.msra.mxu0 %v699
    %723 = vmatpush.msra.mxu0 %v698
    %724 = vmatpush.msra.mxu0 %v697
    %725 = vmatpush.msra.mxu0 %v696
    %726 = vmatpush.msra.mxu0 %v695
    %727 = vmatpush.msra.mxu0 %v694
    %728 = vmatpush.msra.mxu0 %v693
    %729 = vmatpush.msra.mxu0 %v692
    %730 = vmatpush.msra.mxu0 %v691
    %731 = vmatpush.msra.mxu0 %v690
    %732 = vmatpush.msra.mxu0 %v689
    %733 = vmatpush.msra.mxu0 %v688
    %734 = vmatpush.msra.mxu0 %v687
    %735 = vmatpush.msra.mxu0 %v686
    %736 = vmatpush.msra.mxu0 %v685
    %737 = vmatmul.f32.gmra.mxu0 %v471
    %v738 = vpop.f32.mrf.mxu0
    %v739 = vadd.f32 %v719, %v738
    %740 = vdwg.mxu0
    %v741 = vld [vmem:[#allocation3] sm:$0xff]
    %v742 = vld [vmem:[#allocation3 + $0x8] sm:$0xff]
    %v743 = vld [vmem:[#allocation3 + $0x10] sm:$0xff]
    %v744 = vld [vmem:[#allocation3 + $0x18] sm:$0xff]
    %v745 = vld [vmem:[#allocation3 + $0x20] sm:$0xff]
    %v746 = vld [vmem:[#allocation3 + $0x28] sm:$0xff]
    %v747 = vld [vmem:[#allocation3 + $0x30] sm:$0xff]
    %v748 = vld [vmem:[#allocation3 + $0x38] sm:$0xff]
    %v749 = vld [vmem:[#allocation3 + $0x40] sm:$0xff]
    %v750 = vld [vmem:[#allocation3 + $0x48] sm:$0xff]
    %v751 = vld [vmem:[#allocation3 + $0x50] sm:$0xff]
    %v752 = vld [vmem:[#allocation3 + $0x58] sm:$0xff]
    %v753 = vld [vmem:[#allocation3 + $0x60] sm:$0xff]
    %v754 = vld [vmem:[#allocation3 + $0x68] sm:$0xff]
    %v755 = vld [vmem:[#allocation3 + $0x70] sm:$0xff]
    %v756 = vld [vmem:[#allocation3 + $0x78] sm:$0xff]
    %v757 = vld [vmem:[#allocation3 + $0x80] sm:$0xff]
    %v758 = vld [vmem:[#allocation3 + $0x88] sm:$0xff]
    %v759 = vld [vmem:[#allocation3 + $0x90] sm:$0xff]
    %v760 = vld [vmem:[#allocation3 + $0x98] sm:$0xff]
    %v761 = vld [vmem:[#allocation3 + $0xa0] sm:$0xff]
    %v762 = vld [vmem:[#allocation3 + $0xa8] sm:$0xff]
    %v763 = vld [vmem:[#allocation3 + $0xb0] sm:$0xff]
    %v764 = vld [vmem:[#allocation3 + $0xb8] sm:$0xff]
    %v765 = vld [vmem:[#allocation3 + $0xc0] sm:$0xff]
    %v766 = vld [vmem:[#allocation3 + $0xc8] sm:$0xff]
    %v767 = vld [vmem:[#allocation3 + $0xd0] sm:$0xff]
    %v768 = vld [vmem:[#allocation3 + $0xd8] sm:$0xff]
    %v769 = vld [vmem:[#allocation3 + $0xe0] sm:$0xff]
    %v770 = vld [vmem:[#allocation3 + $0xe8] sm:$0xff]
    %v771 = vld [vmem:[#allocation3 + $0xf0] sm:$0xff]
    %v772 = vld [vmem:[#allocation3 + $0xf8] sm:$0xff]
    %773 = vmatpush.msra.mxu0 %v756
    %774 = vmatpush.msra.mxu0 %v755
    %775 = vmatpush.msra.mxu0 %v754
    %776 = vmatpush.msra.mxu0 %v753
    %777 = vmatpush.msra.mxu0 %v752
    %778 = vmatpush.msra.mxu0 %v751
    %779 = vmatpush.msra.mxu0 %v750
    %780 = vmatpush.msra.mxu0 %v749
    %781 = vmatpush.msra.mxu0 %v748
    %782 = vmatpush.msra.mxu0 %v747
    %783 = vmatpush.msra.mxu0 %v746
    %784 = vmatpush.msra.mxu0 %v745
    %785 = vmatpush.msra.mxu0 %v744
    %786 = vmatpush.msra.mxu0 %v743
    %787 = vmatpush.msra.mxu0 %v742
    %788 = vmatpush.msra.mxu0 %v741
    %789 = vmatmul.f32.gmra.mxu0 %v472
    %v790 = vpop.f32.mrf.mxu0
    %v791 = vadd.f32 0.0, %v790
    %792 = vdwg.mxu0
    %793 = vmatpush.msra.mxu0 %v772
    %794 = vmatpush.msra.mxu0 %v771
    %795 = vmatpush.msra.mxu0 %v770
    %796 = vmatpush.msra.mxu0 %v769
    %797 = vmatpush.msra.mxu0 %v768
    %798 = vmatpush.msra.mxu0 %v767
    %799 = vmatpush.msra.mxu0 %v766
    %800 = vmatpush.msra.mxu0 %v765
    %801 = vmatpush.msra.mxu0 %v764
    %802 = vmatpush.msra.mxu0 %v763
    %803 = vmatpush.msra.mxu0 %v762
    %804 = vmatpush.msra.mxu0 %v761
    %805 = vmatpush.msra.mxu0 %v760
    %806 = vmatpush.msra.mxu0 %v759
    %807 = vmatpush.msra.mxu0 %v758
    %808 = vmatpush.msra.mxu0 %v757
    %809 = vmatmul.f32.gmra.mxu0 %v473
    %v810 = vpop.f32.mrf.mxu0
    %v811 = vadd.f32 %v791, %v810
    %812 = vdwg.mxu0
    %v813 = vld [vmem:[%s10] sm:$0x7]
    %v815 = vperm.slane %v813, 0
    %v816 = vperm.slane %v813, 1
    %v817 = vperm.slane %v813, 2
    %v821 = vadd.f32 %v667, %v815
    %v822 = vadd.f32 %v739, %v816
    %v823 = vadd.f32 %v811, %v817
    %vm824 = vcmp.gt.f32.partialorder %v821, 0.0
    %vm825 = vcmp.gt.f32.partialorder %v822, 0.0
    %vm826 = vcmp.gt.f32.partialorder %v823, 0.0
    %v827 = vmul.f32 %v821, 0.01
    %v828 = vmul.f32 %v822, 0.01
    %v829 = vmul.f32 %v823, 0.01
    %v830 = vsel %vm824, %v821, %v827
    %v831 = vsel %vm825, %v822, %v828
    %v832 = vsel %vm826, %v823, %v829
    %v833 = vld [vmem:[%s11] sm:$0xff]
    %v834 = vld [vmem:[%s11 + $0x8] sm:$0xff]
    %v835 = vld [vmem:[%s11 + $0x10] sm:$0xff]
    %v836 = vld [vmem:[%s11 + $0x18] sm:$0xff]
    %v837 = vld [vmem:[%s11 + $0x20] sm:$0xff]
    %v838 = vld [vmem:[%s11 + $0x28] sm:$0xff]
    %v839 = vld [vmem:[%s11 + $0x30] sm:$0xff]
    %v840 = vld [vmem:[%s11 + $0x38] sm:$0xff]
    %v841 = vld [vmem:[%s11 + $0x40] sm:$0xff]
    %v842 = vld [vmem:[%s11 + $0x48] sm:$0xff]
    %v843 = vld [vmem:[%s11 + $0x50] sm:$0xff]
    %v844 = vld [vmem:[%s11 + $0x58] sm:$0xff]
    %v845 = vld [vmem:[%s11 + $0x60] sm:$0xff]
    %v846 = vld [vmem:[%s11 + $0x68] sm:$0xff]
    %v847 = vld [vmem:[%s11 + $0x70] sm:$0xff]
    %v848 = vld [vmem:[%s11 + $0x78] sm:$0xff]
    %v849 = vld [vmem:[%s11 + $0x80] sm:$0xff]
    %v850 = vld [vmem:[%s11 + $0x88] sm:$0xff]
    %v851 = vld [vmem:[%s11 + $0x90] sm:$0xff]
    %v852 = vld [vmem:[%s11 + $0x98] sm:$0xff]
    %v853 = vld [vmem:[%s11 + $0xa0] sm:$0xff]
    %v854 = vld [vmem:[%s11 + $0xa8] sm:$0xff]
    %v855 = vld [vmem:[%s11 + $0xb0] sm:$0xff]
    %v856 = vld [vmem:[%s11 + $0xb8] sm:$0xff]
    %v857 = vld [vmem:[%s11 + $0xc0] sm:$0xff]
    %v858 = vld [vmem:[%s11 + $0xc8] sm:$0xff]
    %v859 = vld [vmem:[%s11 + $0xd0] sm:$0xff]
    %v860 = vld [vmem:[%s11 + $0xd8] sm:$0xff]
    %v861 = vld [vmem:[%s11 + $0xe0] sm:$0xff]
    %v862 = vld [vmem:[%s11 + $0xe8] sm:$0xff]
    %v863 = vld [vmem:[%s11 + $0xf0] sm:$0xff]
    %v864 = vld [vmem:[%s11 + $0xf8] sm:$0xff]
    %v865 = vld [vmem:[%s11 + $0x100] sm:$0xff]
    %v866 = vld [vmem:[%s11 + $0x108] sm:$0xff]
    %v867 = vld [vmem:[%s11 + $0x110] sm:$0xff]
    %v868 = vld [vmem:[%s11 + $0x118] sm:$0xff]
    %v869 = vld [vmem:[%s11 + $0x120] sm:$0xff]
    %v870 = vld [vmem:[%s11 + $0x128] sm:$0xff]
    %v871 = vld [vmem:[%s11 + $0x130] sm:$0xff]
    %v872 = vld [vmem:[%s11 + $0x138] sm:$0xff]
    %v873 = vld [vmem:[%s11 + $0x140] sm:$0xff]
    %v874 = vld [vmem:[%s11 + $0x148] sm:$0xff]
    %v875 = vld [vmem:[%s11 + $0x150] sm:$0xff]
    %v876 = vld [vmem:[%s11 + $0x158] sm:$0xff]
    %v877 = vld [vmem:[%s11 + $0x160] sm:$0xff]
    %v878 = vld [vmem:[%s11 + $0x168] sm:$0xff]
    %v879 = vld [vmem:[%s11 + $0x170] sm:$0xff]
    %v880 = vld [vmem:[%s11 + $0x178] sm:$0xff]
    %v881 = vld [vmem:[%s11 + $0x180] sm:$0xff]
    %v882 = vld [vmem:[%s11 + $0x188] sm:$0xff]
    %v883 = vld [vmem:[%s11 + $0x190] sm:$0xff]
    %v884 = vld [vmem:[%s11 + $0x198] sm:$0xff]
    %v885 = vld [vmem:[%s11 + $0x1a0] sm:$0xff]
    %v886 = vld [vmem:[%s11 + $0x1a8] sm:$0xff]
    %v887 = vld [vmem:[%s11 + $0x1b0] sm:$0xff]
    %v888 = vld [vmem:[%s11 + $0x1b8] sm:$0xff]
    %v889 = vld [vmem:[%s11 + $0x1c0] sm:$0xff]
    %v890 = vld [vmem:[%s11 + $0x1c8] sm:$0xff]
    %v891 = vld [vmem:[%s11 + $0x1d0] sm:$0xff]
    %v892 = vld [vmem:[%s11 + $0x1d8] sm:$0xff]
    %v893 = vld [vmem:[%s11 + $0x1e0] sm:$0xff]
    %v894 = vld [vmem:[%s11 + $0x1e8] sm:$0xff]
    %v895 = vld [vmem:[%s11 + $0x1f0] sm:$0xff]
    %v896 = vld [vmem:[%s11 + $0x1f8] sm:$0xff]
    %v897 = vld [vmem:[%s11 + $0x200] sm:$0xff]
    %v898 = vld [vmem:[%s11 + $0x208] sm:$0xff]
    %v899 = vld [vmem:[%s11 + $0x210] sm:$0xff]
    %v900 = vld [vmem:[%s11 + $0x218] sm:$0xff]
    %v901 = vld [vmem:[%s11 + $0x220] sm:$0xff]
    %v902 = vld [vmem:[%s11 + $0x228] sm:$0xff]
    %v903 = vld [vmem:[%s11 + $0x230] sm:$0xff]
    %v904 = vld [vmem:[%s11 + $0x238] sm:$0xff]
    %v905 = vld [vmem:[%s11 + $0x240] sm:$0xff]
    %v906 = vld [vmem:[%s11 + $0x248] sm:$0xff]
    %v907 = vld [vmem:[%s11 + $0x250] sm:$0xff]
    %v908 = vld [vmem:[%s11 + $0x258] sm:$0xff]
    %v909 = vld [vmem:[%s11 + $0x260] sm:$0xff]
    %v910 = vld [vmem:[%s11 + $0x268] sm:$0xff]
    %v911 = vld [vmem:[%s11 + $0x270] sm:$0xff]
    %v912 = vld [vmem:[%s11 + $0x278] sm:$0xff]
    %v913 = vld [vmem:[%s11 + $0x280] sm:$0xff]
    %v914 = vld [vmem:[%s11 + $0x288] sm:$0xff]
    %v915 = vld [vmem:[%s11 + $0x290] sm:$0xff]
    %v916 = vld [vmem:[%s11 + $0x298] sm:$0xff]
    %v917 = vld [vmem:[%s11 + $0x2a0] sm:$0xff]
    %v918 = vld [vmem:[%s11 + $0x2a8] sm:$0xff]
    %v919 = vld [vmem:[%s11 + $0x2b0] sm:$0xff]
    %v920 = vld [vmem:[%s11 + $0x2b8] sm:$0xff]
    %v921 = vld [vmem:[%s11 + $0x2c0] sm:$0xff]
    %v922 = vld [vmem:[%s11 + $0x2c8] sm:$0xff]
    %v923 = vld [vmem:[%s11 + $0x2d0] sm:$0xff]
    %v924 = vld [vmem:[%s11 + $0x2d8] sm:$0xff]
    %v925 = vld [vmem:[%s11 + $0x2e0] sm:$0xff]
    %v926 = vld [vmem:[%s11 + $0x2e8] sm:$0xff]
    %v927 = vld [vmem:[%s11 + $0x2f0] sm:$0xff]
    %v928 = vld [vmem:[%s11 + $0x2f8] sm:$0xff]
    %v929 = vld [vmem:[%s12] sm:$0x3]
    %v931 = vperm.slane %v929, 0
    %v932 = vperm.slane %v929, 1
    %935 = vmatpush.msra.mxu0 %v863
    %936 = vmatpush.msra.mxu0 %v861
    %937 = vmatpush.msra.mxu0 %v859
    %938 = vmatpush.msra.mxu0 %v857
    %939 = vmatpush.msra.mxu0 %v855
    %940 = vmatpush.msra.mxu0 %v853
    %941 = vmatpush.msra.mxu0 %v851
    %942 = vmatpush.msra.mxu0 %v849
    %943 = vmatpush.msra.mxu0 %v847
    %944 = vmatpush.msra.mxu0 %v845
    %945 = vmatpush.msra.mxu0 %v843
    %946 = vmatpush.msra.mxu0 %v841
    %947 = vmatpush.msra.mxu0 %v839
    %948 = vmatpush.msra.mxu0 %v837
    %949 = vmatpush.msra.mxu0 %v835
    %950 = vmatpush.msra.mxu0 %v833
    %951 = vmatmul.f32.gmra.mxu0 %v830
    %v952 = vpop.f32.mrf.mxu0
    %v953 = vadd.f32 %v931, %v952
    %954 = vdwg.mxu0
    %955 = vmatpush.msra.mxu0 %v895
    %956 = vmatpush.msra.mxu0 %v893
    %957 = vmatpush.msra.mxu0 %v891
    %958 = vmatpush.msra.mxu0 %v889
    %959 = vmatpush.msra.mxu0 %v887
    %960 = vmatpush.msra.mxu0 %v885
    %961 = vmatpush.msra.mxu0 %v883
    %962 = vmatpush.msra.mxu0 %v881
    %963 = vmatpush.msra.mxu0 %v879
    %964 = vmatpush.msra.mxu0 %v877
    %965 = vmatpush.msra.mxu0 %v875
    %966 = vmatpush.msra.mxu0 %v873
    %967 = vmatpush.msra.mxu0 %v871
    %968 = vmatpush.msra.mxu0 %v869
    %969 = vmatpush.msra.mxu0 %v867
    %970 = vmatpush.msra.mxu0 %v865
    %971 = vmatmul.f32.gmra.mxu0 %v831
    %v972 = vpop.f32.mrf.mxu0
    %v973 = vadd.f32 %v953, %v972
    %974 = vdwg.mxu0
    %975 = vmatpush.msra.mxu0 %v927
    %976 = vmatpush.msra.mxu0 %v925
    %977 = vmatpush.msra.mxu0 %v923
    %978 = vmatpush.msra.mxu0 %v921
    %979 = vmatpush.msra.mxu0 %v919
    %980 = vmatpush.msra.mxu0 %v917
    %981 = vmatpush.msra.mxu0 %v915
    %982 = vmatpush.msra.mxu0 %v913
    %983 = vmatpush.msra.mxu0 %v911
    %984 = vmatpush.msra.mxu0 %v909
    %985 = vmatpush.msra.mxu0 %v907
    %986 = vmatpush.msra.mxu0 %v905
    %987 = vmatpush.msra.mxu0 %v903
    %988 = vmatpush.msra.mxu0 %v901
    %989 = vmatpush.msra.mxu0 %v899
    %990 = vmatpush.msra.mxu0 %v897
    %991 = vmatmul.f32.gmra.mxu0 %v832
    %v992 = vpop.f32.mrf.mxu0
    %v993 = vadd.f32 %v973, %v992
    %994 = vdwg.mxu0
    %995 = vmatpush.msra.mxu0 %v864
    %996 = vmatpush.msra.mxu0 %v862
    %997 = vmatpush.msra.mxu0 %v860
    %998 = vmatpush.msra.mxu0 %v858
    %999 = vmatpush.msra.mxu0 %v856
    %1000 = vmatpush.msra.mxu0 %v854
    %1001 = vmatpush.msra.mxu0 %v852
    %1002 = vmatpush.msra.mxu0 %v850
    %1003 = vmatpush.msra.mxu0 %v848
    %1004 = vmatpush.msra.mxu0 %v846
    %1005 = vmatpush.msra.mxu0 %v844
    %1006 = vmatpush.msra.mxu0 %v842
    %1007 = vmatpush.msra.mxu0 %v840
    %1008 = vmatpush.msra.mxu0 %v838
    %1009 = vmatpush.msra.mxu0 %v836
    %1010 = vmatpush.msra.mxu0 %v834
    %1011 = vmatmul.f32.gmra.mxu0 %v830
    %v1012 = vpop.f32.mrf.mxu0
    %v1013 = vadd.f32 %v932, %v1012
    %1014 = vdwg.mxu0
    %1015 = vmatpush.msra.mxu0 %v896
    %1016 = vmatpush.msra.mxu0 %v894
    %1017 = vmatpush.msra.mxu0 %v892
    %1018 = vmatpush.msra.mxu0 %v890
    %1019 = vmatpush.msra.mxu0 %v888
    %1020 = vmatpush.msra.mxu0 %v886
    %1021 = vmatpush.msra.mxu0 %v884
    %1022 = vmatpush.msra.mxu0 %v882
    %1023 = vmatpush.msra.mxu0 %v880
    %1024 = vmatpush.msra.mxu0 %v878
    %1025 = vmatpush.msra.mxu0 %v876
    %1026 = vmatpush.msra.mxu0 %v874
    %1027 = vmatpush.msra.mxu0 %v872
    %1028 = vmatpush.msra.mxu0 %v870
    %1029 = vmatpush.msra.mxu0 %v868
    %1030 = vmatpush.msra.mxu0 %v866
    %1031 = vmatmul.f32.gmra.mxu0 %v831
    %v1032 = vpop.f32.mrf.mxu0
    %v1033 = vadd.f32 %v1013, %v1032
    %1034 = vdwg.mxu0
    %1035 = vmatpush.msra.mxu0 %v928
    %1036 = vmatpush.msra.mxu0 %v926
    %1037 = vmatpush.msra.mxu0 %v924
    %1038 = vmatpush.msra.mxu0 %v922
    %1039 = vmatpush.msra.mxu0 %v920
    %1040 = vmatpush.msra.mxu0 %v918
    %1041 = vmatpush.msra.mxu0 %v916
    %1042 = vmatpush.msra.mxu0 %v914
    %1043 = vmatpush.msra.mxu0 %v912
    %1044 = vmatpush.msra.mxu0 %v910
    %1045 = vmatpush.msra.mxu0 %v908
    %1046 = vmatpush.msra.mxu0 %v906
    %1047 = vmatpush.msra.mxu0 %v904
    %1048 = vmatpush.msra.mxu0 %v902
    %1049 = vmatpush.msra.mxu0 %v900
    %1050 = vmatpush.msra.mxu0 %v898
    %1051 = vmatmul.f32.gmra.mxu0 %v832
    %v1052 = vpop.f32.mrf.mxu0
    %v1053 = vadd.f32 %v1033, %v1052
    %1054 = vdwg.mxu0
    %vm1055 = vcmp.gt.f32.partialorder %v993, 0.0
    %vm1056 = vcmp.gt.f32.partialorder %v1053, 0.0
    %v1057 = vmul.f32 %v993, 0.01
    %v1058 = vmul.f32 %v1053, 0.01
    %v1059 = vsel %vm1055, %v993, %v1057
    %v1060 = vsel %vm1056, %v1053, %v1058
    %v1061 = vld [vmem:[%s13] sm:$0xff]
    %v1062 = vld [vmem:[%s13 + $0x8] sm:$0xff]
    %v1063 = vld [vmem:[%s13 + $0x10] sm:$0xff]
    %v1064 = vld [vmem:[%s13 + $0x18] sm:$0xff]
    %v1065 = vld [vmem:[%s13 + $0x20] sm:$0xff]
    %v1066 = vld [vmem:[%s13 + $0x28] sm:$0xff]
    %v1067 = vld [vmem:[%s13 + $0x30] sm:$0xff]
    %v1068 = vld [vmem:[%s13 + $0x38] sm:$0xff]
    %v1069 = vld [vmem:[%s13 + $0x40] sm:$0xff]
    %v1070 = vld [vmem:[%s13 + $0x48] sm:$0xff]
    %v1071 = vld [vmem:[%s13 + $0x50] sm:$0xff]
    %v1072 = vld [vmem:[%s13 + $0x58] sm:$0xff]
    %v1073 = vld [vmem:[%s13 + $0x60] sm:$0xff]
    %v1074 = vld [vmem:[%s13 + $0x68] sm:$0xff]
    %v1075 = vld [vmem:[%s13 + $0x70] sm:$0xff]
    %v1076 = vld [vmem:[%s13 + $0x78] sm:$0xff]
    %v1077 = vld [vmem:[%s14] sm:$0x1]
    %v1079 = vperm.slane %v1077, 0
    %1081 = vmatpush.msra.mxu0 %v1076
    %1082 = vmatpush.msra.mxu0 %v1075
    %1083 = vmatpush.msra.mxu0 %v1074
    %1084 = vmatpush.msra.mxu0 %v1073
    %1085 = vmatpush.msra.mxu0 %v1072
    %1086 = vmatpush.msra.mxu0 %v1071
    %1087 = vmatpush.msra.mxu0 %v1070
    %1088 = vmatpush.msra.mxu0 %v1069
    %1089 = vmatpush.msra.mxu0 %v1068
    %1090 = vmatpush.msra.mxu0 %v1067
    %1091 = vmatpush.msra.mxu0 %v1066
    %1092 = vmatpush.msra.mxu0 %v1065
    %1093 = vmatpush.msra.mxu0 %v1064
    %1094 = vmatpush.msra.mxu0 %v1063
    %1095 = vmatpush.msra.mxu0 %v1062
    %1096 = vmatpush.msra.mxu0 %v1061
    %1097 = vmatmul.f32.gmra.mxu0 %v474
    %v1098 = vpop.f32.mrf.mxu0
    %v1099 = vadd.f32 %v1079, %v1098
    %1100 = vdwg.mxu0
    %vm1101 = vcmp.gt.f32.partialorder %v1099, 0.0
    %v1102 = vmul.f32 %v1099, 0.01
    %v1103 = vsel %vm1101, %v1099, %v1102
    %v1104 = vld [vmem:[%s15] sm:$0x7]
    %v1105 = vld [vmem:[%s16] sm:$0x1]
    %v1106 = vperm.slane %v1104, 0
    %v1107 = vmul.f32 %v1103, %v1106
    %vm1108 = vcmask 523264
    %v1109 = vsel %vm1108, %v1107, 0.0
    %1110 = vadd.xlane.f32.xlu0 %v1109
    %v1111 = vpop.xlane.xlu0 %1110
    %v1113 = vperm.slane %v1105, 0
    %v1115 = vadd.f32 %v1111, %v1113
    %v1116 = vperm.slane %v1104, 1
    %v1117 = vmul.f32 %v1103, %v1116
    %v1118 = vsel %vm1108, %v1117, 0.0
    %1119 = vadd.xlane.f32.xlu0 %v1118
    %v1120 = vpop.xlane.xlu0 %1119
    %v1121 = vadd.f32 %v1120, %v1113
    %v1122 = vperm.slane %v1104, 2
    %v1123 = vmul.f32 %v1103, %v1122
    %v1124 = vsel %vm1108, %v1123, 0.0
    %1125 = vadd.xlane.f32.xlu0 %v1124
    %v1126 = vpop.xlane.xlu0 %1125
    %v1127 = vadd.f32 %v1126, %v1113
    %1129 = vrot.lane.b32.xlu0 %v1121, 127
    %v1130 = vpop.permute.xlu0 %1129
    %v1132 = vmax.f32 %v1115, %v1130
    %1134 = vrot.lane.b32.xlu0 %v1127, 126
    %v1135 = vpop.permute.xlu0 %1134
    %v1137 = vmax.f32 %v1132, %v1135
    %v1138 = vsub.f32 %v1115, %v1137
    %v1139 = vmul.f32 %v1138, 1.442695
    %v1140 = vpow.pop %v1139
    %1142 = vrot.lane.b32.xlu0 %v1137, 1
    %v1143 = vpop.permute.xlu0 %1142
    %v1145 = vsub.f32 %v1121, %v1143
    %v1146 = vmul.f32 %v1145, 1.442695
    %v1147 = vpow.pop %v1146
    %1148 = vrot.lane.b32.xlu0 %v1137, 2
    %v1149 = vpop.permute.xlu0 %1148
    %v1151 = vsub.f32 %v1127, %v1149
    %v1152 = vmul.f32 %v1151, 1.442695
    %v1153 = vpow.pop %v1152
    %1155 = vrot.lane.b32.xlu0 %v1147, 127
    %v1156 = vpop.permute.xlu0 %1155
    %v1158 = vadd.f32 %v1140, %v1156
    %1160 = vrot.lane.b32.xlu0 %v1153, 126
    %v1161 = vpop.permute.xlu0 %1160
    %v1163 = vadd.f32 %v1158, %v1161
    %v1164 = vrcp.pop %v1163
    %v1165 = vmul.f32 %v1163, %v1164
    %v1166 = vsub.f32 1.0, %v1165
    %v1167 = vmul.f32 %v1164, %v1166
    %v1168 = vadd.f32 %v1164, %v1167
    %vm1169 = vweird.f32 %v1163
    %vm1170 = vweird.f32 %v1164
    %vm1171 = vmor %vm1169, %vm1170
    %v1172 = vsel %vm1171, %v1164, %v1168
    %v1173 = vand.u32 2147483647, %v1163
    %vm1174 = vcmp.eq.f32.partialorder %v1173, 8.507059e+37
    %v1175 = vand.u32 %v1163, 2147483648
    %v1176 = vor.u32 1.1754944e-38, %v1175
    %v1177 = vsel %vm1174, %v1176, %v1172
    %v1178 = vmul.f32 1.0, %v1177
    %v1179 = vmul.f32 %v1140, %v1178
    %1181 = vset.pattern.permute.xlu0 0
    %1182 = vperm.xlu0 %1181, %v1179
    %v1183 = vpop.permute.xlu0 %1182
    %v1185 = vmul.f32 %v1059, %v1183
    %1187 = vrot.lane.b32.xlu0 %v1178, 1
    %v1188 = vpop.permute.xlu0 %1187
    %v1190 = vmul.f32 %v1147, %v1188
    %1192 = vset.pattern.permute.xlu0 1
    %1193 = vperm.xlu0 %1192, %v1190
    %v1194 = vpop.permute.xlu0 %1193
    %v1196 = vmul.f32 %v1059, %v1194
    %1198 = vrot.lane.b32.xlu0 %v1196, 64
    %v1199 = vpop.permute.xlu0 %1198
    %v1201 = vadd.f32 %v1185, %v1199
    %1202 = vrot.lane.b32.xlu0 %v1178, 2
    %v1203 = vpop.permute.xlu0 %1202
    %v1205 = vmul.f32 %v1153, %v1203
    %1207 = vset.pattern.permute.xlu0 2
    %1208 = vperm.xlu0 %1207, %v1205
    %v1209 = vpop.permute.xlu0 %1208
    %v1211 = vmul.f32 %v1060, %v1209
    %v1212 = vadd.f32 %v1201, %v1211
    %v1213 = vld [vmem:[%s17] sm:$0xff]
    %v1214 = vld [vmem:[%s17 + $0x8] sm:$0xff]
    %v1215 = vld [vmem:[%s17 + $0x10] sm:$0xff]
    %v1216 = vld [vmem:[%s17 + $0x18] sm:$0xff]
    %v1217 = vld [vmem:[%s17 + $0x20] sm:$0xff]
    %v1218 = vld [vmem:[%s17 + $0x28] sm:$0xff]
    %v1219 = vld [vmem:[%s17 + $0x30] sm:$0xff]
    %v1220 = vld [vmem:[%s17 + $0x38] sm:$0xff]
    %v1222 = vsel %vm1108, %v596, 0
    %1224 = vmatpush.msra.mxu0 0.0
    %1225 = vmatpush.msra.mxu0 0.0
    %1226 = vmatpush.msra.mxu0 0.0
    %1227 = vmatpush.msra.mxu0 0.0
    %1228 = vmatpush.msra.mxu0 0.0
    %1229 = vmatpush.msra.mxu0 0.0
    %1230 = vmatpush.msra.mxu0 0.0
    %1231 = vmatpush.msra.mxu0 0.0
    %1232 = vmatpush.msra.mxu0 %v1220
    %1233 = vmatpush.msra.mxu0 %v1219
    %1234 = vmatpush.msra.mxu0 %v1218
    %1235 = vmatpush.msra.mxu0 %v1217
    %1236 = vmatpush.msra.mxu0 %v1216
    %1237 = vmatpush.msra.mxu0 %v1215
    %1238 = vmatpush.msra.mxu0 %v1214
    %1239 = vmatpush.msra.mxu0 %v1213
    %1240 = vmatmul.f32.gmra.mxu0 %v1222
    %v1241 = vpop.f32.mrf.mxu0
    %v1242 = vadd.f32 0.0, %v1241
    %1243 = vdwg.mxu0
    %v1244 = vadd.f32 %v415, %v1242
    %v1245 = vld [vmem:[#allocation6] sm:$0xff]
    %v1246 = vld [vmem:[#allocation6 + $0x8] sm:$0xff]
    %v1247 = vld [vmem:[#allocation6 + $0x10] sm:$0xff]
    %v1248 = vld [vmem:[#allocation6 + $0x18] sm:$0xff]
    %v1249 = vld [vmem:[#allocation6 + $0x20] sm:$0xff]
    %v1250 = vld [vmem:[#allocation6 + $0x28] sm:$0xff]
    %v1251 = vld [vmem:[#allocation6 + $0x30] sm:$0xff]
    %v1252 = vld [vmem:[#allocation6 + $0x38] sm:$0xff]
    %v1254 = vsel %vm1108, %v1212, 0
    %1256 = vmatpush.msra.mxu0 0.0
    %1257 = vmatpush.msra.mxu0 0.0
    %1258 = vmatpush.msra.mxu0 0.0
    %1259 = vmatpush.msra.mxu0 0.0
    %1260 = vmatpush.msra.mxu0 0.0
    %1261 = vmatpush.msra.mxu0 0.0
    %1262 = vmatpush.msra.mxu0 0.0
    %1263 = vmatpush.msra.mxu0 0.0
    %1264 = vmatpush.msra.mxu0 %v1252
    %1265 = vmatpush.msra.mxu0 %v1251
    %1266 = vmatpush.msra.mxu0 %v1250
    %1267 = vmatpush.msra.mxu0 %v1249
    %1268 = vmatpush.msra.mxu0 %v1248
    %1269 = vmatpush.msra.mxu0 %v1247
    %1270 = vmatpush.msra.mxu0 %v1246
    %1271 = vmatpush.msra.mxu0 %v1245
    %1272 = vmatmul.f32.gmra.mxu0 %v1254
    %v1273 = vpop.f32.mrf.mxu0
    %v1274 = vadd.f32 0.0, %v1273
    %1275 = vdwg.mxu0
    %v1276 = vadd.f32 %v1244, %v1274
    %v1277 = vld [vmem:[%s19] sm:$0x1]
    %v1279 = vperm.slane %v1277, 0
    %v1281 = vadd.f32 %v1276, %v1279
    %vm1282 = vcmp.gt.f32.partialorder %v1281, 0.0
    %v1283 = vmul.f32 %v1281, 0.01
    %v1284 = vsel %vm1282, %v1281, %v1283
    %v1285 = vld [vmem:[%s20] sm:$0x1]
    %v1287 = vperm.slane %v1285, 0
    %v1289 = vmul.f32 %v1284, %v1287
    %v1290 = vsel %vm1108, %v1289, 0.0
    %1291 = vadd.xlane.f32.xlu0 %v1290
    %v1292 = vpop.xlane.xlu0 %1291
    %v1293 = vld [vmem:[#allocation2] sm:$0x1]
    %v1295 = vperm.slane %v1293, 0
    %v1297 = vadd.f32 %v1292, %v1295
    %v1298 = vxor.u32 %v1297, 2147483648
    %v1299 = vmul.f32 %v1298, 1.442695
    %v1300 = vpow.pop %v1299
    %v1301 = vadd.f32 %v1300, 1.0
    %v1302 = vrcp.pop %v1301
    %v1303 = vmul.f32 %v1301, %v1302
    %v1304 = vsub.f32 1.0, %v1303
    %v1305 = vmul.f32 %v1302, %v1304
    %v1306 = vadd.f32 %v1302, %v1305
    %vm1307 = vweird.f32 %v1301
    %vm1308 = vweird.f32 %v1302
    %vm1309 = vmor %vm1307, %vm1308
    %v1310 = vsel %vm1309, %v1302, %v1306
    %v1311 = vand.u32 2147483647, %v1301
    %vm1312 = vcmp.eq.f32.partialorder %v1311, 8.507059e+37
    %v1313 = vand.u32 %v1301, 2147483648
    %v1314 = vor.u32 1.1754944e-38, %v1313
    %v1315 = vsel %vm1312, %v1314, %v1310
    %v1316 = vmul.f32 1.0, %v1315
    %1318 = vset.pattern.permute.xlu0 0
    %1319 = vperm.xlu0 %1318, %v1316
    %v1320 = vpop.permute.xlu0 %1319
    %v1322 = vmul.f32 %v1320, %v596
    %v1323 = vsub.f32 1.0, %v1316
    %1325 = vset.pattern.permute.xlu0 0
    %1326 = vperm.xlu0 %1325, %v1323
    %v1327 = vpop.permute.xlu0 %1326
    %v1329 = vmul.f32 %v1327, %v1212
    %v1330 = vadd.f32 %v1322, %v1329
    %v1331 = vld [vmem:[%s22] sm:$0xff]
    %v1332 = vld [vmem:[%s22 + $0x8] sm:$0xff]
    %v1333 = vld [vmem:[%s22 + $0x10] sm:$0xff]
    %v1334 = vld [vmem:[%s22 + $0x18] sm:$0xff]
    %v1335 = vld [vmem:[%s22 + $0x20] sm:$0xff]
    %v1336 = vld [vmem:[%s22 + $0x28] sm:$0xff]
    %v1337 = vld [vmem:[%s22 + $0x30] sm:$0xff]
    %v1338 = vld [vmem:[%s22 + $0x38] sm:$0xff]
    %v1339 = vld [vmem:[%s23] sm:$0x1]
    %v1341 = vperm.slane %v1339, 0
    %v1344 = vsel %vm1108, %v1330, 0
    %1346 = vmatpush.msra.mxu0 0.0
    %1347 = vmatpush.msra.mxu0 0.0
    %1348 = vmatpush.msra.mxu0 0.0
    %1349 = vmatpush.msra.mxu0 0.0
    %1350 = vmatpush.msra.mxu0 0.0
    %1351 = vmatpush.msra.mxu0 0.0
    %1352 = vmatpush.msra.mxu0 0.0
    %1353 = vmatpush.msra.mxu0 0.0
    %1354 = vmatpush.msra.mxu0 %v1338
    %1355 = vmatpush.msra.mxu0 %v1337
    %1356 = vmatpush.msra.mxu0 %v1336
    %1357 = vmatpush.msra.mxu0 %v1335
    %1358 = vmatpush.msra.mxu0 %v1334
    %1359 = vmatpush.msra.mxu0 %v1333
    %1360 = vmatpush.msra.mxu0 %v1332
    %1361 = vmatpush.msra.mxu0 %v1331
    %1362 = vmatmul.f32.gmra.mxu0 %v1344
    %v1363 = vpop.f32.mrf.mxu0
    %v1364 = vadd.f32 %v1341, %v1363
    %1365 = vdwg.mxu0
    %v1366 = vlaneseq
    %v1367 = vand.u32 %v1366, 127
    %vm1368 = vcmp.lt.s32.totalorder %v1367, 4
    %v1369 = vtanh.pop %v1364
    %v1370 = vxor.u32 %v1364, 2147483648
    %v1371 = vmul.f32 %v1370, 1.442695
    %v1372 = vpow.pop %v1371
    %v1373 = vadd.f32 %v1372, 1.0
    %v1374 = vrcp.pop %v1373
    %v1375 = vmul.f32 %v1373, %v1374
    %v1376 = vsub.f32 1.0, %v1375
    %v1377 = vmul.f32 %v1374, %v1376
    %v1378 = vadd.f32 %v1374, %v1377
    %vm1379 = vweird.f32 %v1373
    %vm1380 = vweird.f32 %v1374
    %vm1381 = vmor %vm1379, %vm1380
    %v1382 = vsel %vm1381, %v1374, %v1378
    %v1383 = vand.u32 2147483647, %v1373
    %vm1384 = vcmp.eq.f32.partialorder %v1383, 8.507059e+37
    %v1385 = vand.u32 %v1373, 2147483648
    %v1386 = vor.u32 1.1754944e-38, %v1385
    %v1387 = vsel %vm1384, %v1386, %v1382
    %v1388 = vmul.f32 1.0, %v1387
    %v1389 = vmul.f32 %v1388, 0.69
    %v1390 = vadd.f32 %v1389, 0.01
    %v1391 = vsel %vm1368, %v1369, %v1390
    %vm1392 = vcmask 64512
    %1393 = vst.msk [vmem:[#allocation8] sm:$0xff] %vm1392, %v1391
    // Predicated region
    $region106: #{tpu_custom_call.1} parent=1 // pred_check
      _
    $region107: #{tpu_custom_call.1} parent=1 // pred_check_branch
      %1395 = sbr.rel (0) target = $region109
    $region108: #{tpu_custom_call.1} parent=1 // pred_region
      %1397 = vsyncadd [#allocation5], 0
      %s1399 = sshll.u32 [#allocation8], 4
      %s1400 = int_to_ptr.vmem [resolvable:$true] %s1399
      %s1401 = sshll.u32 %s24, 4
      %s1402 = int_to_ptr.hbm [resolvable:$true] %s1401
      %1404 = dma.vmem_to_hbm [thread:$0]  %s1400, 128, %s1402, [#allocation5]
    $region109: #{tpu_custom_call.1} parent=1 // pred_fallthru
      _
    // Predicated region
    $region110: #{tpu_custom_call.1} parent=1 // pred_check
      _
    $region111: #{tpu_custom_call.1} parent=1 // pred_check_branch
      %1406 = sbr.rel (0) target = $region113
    $region112: #{tpu_custom_call.1} parent=1 // pred_region
      %1408 = dma.done [#allocation5], 128
    $region113: #{tpu_custom_call.1} parent=1 // pred_fallthru
      _
    %1409 = vsyncpa [#allocation4], 1
    %1410 = vsyncpa [#allocation7], 1
    %1411 = vsyncpa [#allocation5], 1

</llo_original>
